<compile_context>
chip_gen: v7x
topology: tpu7x:2x2x1
jax: 0.10.0
libtpu: 0.0.40
codegen_flags: <defaults>
</compile_context>

<pallas_src>
import math

import jax
import jax.numpy as jnp
import numpy as np
from jax import lax
from jax.experimental import pallas as pl
from jax.experimental.pallas import tpu as pltpu

# ----- small config consistent with the module -----
B, S = 2, 8
BS = B * S              # tokens folded into the sublane dim
H = 32                  # hidden_size
NH = 4                  # num_attention_heads
NKV = 2                 # num_key_value_heads
HD = H // NH            # head_dim = 8
HD2 = HD // 2
NHHD = NH * HD          # 32
I = 64                  # intermediate_size
L = H // 8              # latent_size (compression_ratio=8)
NE = 9                  # 8 routed experts + 1 shared expert
TOPK = 2
EPS = 1e-5              # rms_norm_eps
SCALE = 1.0 / math.sqrt(HD)
GROUP = NH // NKV
NEG = -1e9

# ---- packed-input column offsets (segments 128-lane aligned) ----
# aux slab (f32, BS rows): [ x | pad | cos(q|k) | sin(q|k) | mask ]
AUX_X = 0                      # [0, 32)
AUX_COS = 128                  # [128, 192)
AUX_SIN = 192                  # [192, 256)
AUX_MASK = 256                 # [256, 272)
AUX_W = 272

# weight slab (bf16, H rows):
#   seg A [0,192)    : [q|k|qrot|krot|v|lat]     (ln1 folded into rows)
#   seg B [256,288)  : wo
#   seg C [384,1792) : [gate(576)|pad|up(576)|pad|router(9)|pad] (ln2 folded)
W_QKVL = 0
W_QKVL_W = 6 * NHHD            # 192
W_WO = 256
W_H2 = 384
GU_PAD = 640                   # gate / up each padded to 5 lane tiles
G_OFF = 0
U_OFF = GU_PAD
R_OFF = 2 * GU_PAD             # 1280
H2_W = 2 * GU_PAD + 128        # 1408
W_SLAB = W_H2 + H2_W           # 1792


def decoder_layer_kernel(aux_ref, wslab_ref, wd_ref, out_ref):
    f32, bf16 = jnp.float32, jnp.bfloat16

    x = aux_ref[:, AUX_X:AUX_X + H]                      # (BS, H) f32
    cos = aux_ref[:, AUX_COS:AUX_COS + 2 * NHHD]         # (BS, 64)
    sin = aux_ref[:, AUX_SIN:AUX_SIN + 2 * NHHD]         # (BS, 64)
    mask = aux_ref[:, AUX_MASK:AUX_MASK + BS]            # (BS, BS)

    def rms(v):   # RMSNorm weights are folded into the weight-slab rows
        return v * lax.rsqrt(jnp.mean(v * v, axis=-1, keepdims=True) + EPS)

    # ---- input_layernorm + fused q|k|qrot|krot|v|latent projection ----
    h1_16 = rms(x).astype(bf16)
    proj = jnp.dot(h1_16, wslab_ref[:, W_QKVL:W_QKVL + W_QKVL_W],
                   preferred_element_type=f32)           # (BS, 192)

    # RoPE: one full-width FMA on the flat [q|k] layout (rotate_half folded
    # into the qrot/krot weight columns in the wrapper).
    qk = proj[:, 0:2 * NHHD] * cos + proj[:, 2 * NHHD:4 * NHHD] * sin   # (BS, 64)
    vfl = proj[:, 4 * NHHD:5 * NHHD]                     # (BS, 32) values (GQA pre-repeated)
    lat = proj[:, 5 * NHHD:6 * NHHD]                     # (BS, 32) latent branch (gate folded)

    # ---- attention: statically unrolled over NH=4 heads, static lane slices ----
    ctx_heads = []
    for h in range(NH):
        qh = qk[:, h * HD:(h + 1) * HD]                  # (BS, HD)
        kh = qk[:, NHHD + h * HD:NHHD + (h + 1) * HD]
        vh = vfl[:, h * HD:(h + 1) * HD]
        s = lax.dot_general(qh, kh, (((1,), (1,)), ((), ())),
                            preferred_element_type=f32) * SCALE + mask   # (BS, BS)
        s = s - jnp.max(s, axis=-1, keepdims=True)
        pr = jnp.exp(s)
        pr = pr * pl.reciprocal(jnp.sum(pr, axis=-1, keepdims=True), approx=True)
        ctx_heads.append(jnp.dot(pr, vh, preferred_element_type=f32))
    ctx = jnp.concatenate(ctx_heads, axis=-1)            # (BS, 32) flat context

    attn = jnp.dot(ctx.astype(bf16), wslab_ref[:, W_WO:W_WO + H],
                   preferred_element_type=f32)           # original (H,H) wo
    res1 = x + attn + lat

    # ---- post_attention_layernorm + fused gate|up|router matmul ----
    h2_16 = rms(res1).astype(bf16)
    gur = jnp.dot(h2_16, wslab_ref[:, W_H2:W_H2 + H2_W],
                  preferred_element_type=f32)            # (BS, 1408)
    g = gur[:, G_OFF:G_OFF + NE * I]                     # (BS, 576)
    u = gur[:, U_OFF:U_OFF + NE * I]                     # (BS, 576)
    logits = gur[:, R_OFF:R_OFF + NE]                    # (BS, 9)

    # router softmax + manual top-2 (argmax twice, min-index tie-break == top_k)
    logits = logits - jnp.max(logits, axis=-1, keepdims=True)
    pe = jnp.exp(logits)
    probs = pe * pl.reciprocal(jnp.sum(pe, axis=-1, keepdims=True), approx=True)

    iota_e = lax.broadcasted_iota(jnp.int32, (BS, NE), 1)
    m1 = jnp.max(probs, axis=-1, keepdims=True)
    idx1 = jnp.min(jnp.where(probs == m1, iota_e, NE), axis=-1, keepdims=True)
    probs2 = jnp.where(iota_e == idx1, -1.0, probs)
    m2 = jnp.max(probs2, axis=-1, keepdims=True)
    idx2 = jnp.min(jnp.where(probs2 == m2, iota_e, NE), axis=-1, keepdims=True)
    rden = pl.reciprocal(m1 + m2, approx=True)
    w1, w2 = m1 * rden, m2 * rden

    # per-column top-2 gate (column j belongs to expert j // I); range compare
    # on a lane iota avoids in-kernel integer division.
    col = lax.broadcasted_iota(jnp.int32, (BS, NE * I), 1)
    lo1, lo2 = idx1 * I, idx2 * I
    gatec = (jnp.where((col >= lo1) & (col < lo1 + I), w1, 0.0)
             + jnp.where((col >= lo2) & (col < lo2 + I), w2, 0.0))   # (BS, 576)

    act = g * pl.reciprocal(1.0 + jnp.exp(-g), approx=True) * u * gatec   # SiLU*up*gate
    moe = jnp.dot(act.astype(bf16), wd_ref[...], preferred_element_type=f32)  # (BS, H)

    out_ref[...] = (res1 + moe).astype(out_ref.dtype)


# ------------------- wrapper: weight re-layout + pallas_call -------------------
def _prep(x, cos, sin, p):
    f32, bf16 = jnp.float32, jnp.bfloat16

    # flat per-head projection weights (head h occupies cols h*HD:(h+1)*HD);
    # KV heads pre-repeated for GQA.
    wq = p["wq"]                                                       # (H, 32)
    wk = jnp.repeat(p["wk"].reshape(H, NKV, HD), GROUP, axis=1).reshape(H, NHHD)
    wv = jnp.repeat(p["wv"].reshape(H, NKV, HD), GROUP, axis=1).reshape(H, NHHD)

    def rot(wflat):     # h @ rot(w) == rotate_half(h @ w), applied per head
        w3 = wflat.reshape(H, NH, HD)
        return jnp.concatenate([-w3[..., HD2:], w3[..., :HD2]], axis=-1).reshape(H, NHHD)

    wlat = p["gate"][0, 0] * (p["wtl"] @ p["wfl"])                     # fold latent gate

    zc = lambda n: jnp.zeros((H, n), f32)
    segA = p["ln1"].reshape(H, 1) * jnp.concatenate(
        [wq, wk, rot(wq), rot(wk), wv, wlat], axis=1)                  # (H, 192), ln1 folded

    wg_cat = p["wg"].transpose(1, 0, 2).reshape(H, NE * I)             # (H, 576)
    wu_cat = p["wu"].transpose(1, 0, 2).reshape(H, NE * I)
    segC = p["ln2"].reshape(H, 1) * jnp.concatenate(
        [wg_cat, zc(GU_PAD - NE * I), wu_cat, zc(GU_PAD - NE * I),
         p["wr"], zc(128 - NE)], axis=1)                               # (H, 1408), ln2 folded

    wslab = jnp.concatenate(
        [segA, zc(W_WO - W_QKVL_W), p["wo"], zc(W_H2 - W_WO - H), segC],
        axis=1).astype(bf16)                                           # (H, 1792)

    wd = p["wd"].reshape(NE * I, H).astype(bf16)                       # (576, H)

    # packed f32 slab: x | pad | cos(q|k) | sin(q|k) | batch block mask
    x2 = x.reshape(BS, H)
    cos_t = jnp.tile(cos, (B, 2 * NH))                                 # (BS, 64)
    sin_t = jnp.tile(sin, (B, 2 * NH))
    bid = jnp.arange(BS) // S
    mask = jnp.where(bid[:, None] == bid[None, :], 0.0, NEG).astype(f32)
    zr = lambda n: jnp.zeros((BS, n), f32)
    aux = jnp.concatenate([x2, zr(AUX_COS - H), cos_t, sin_t, mask], axis=1)  # (BS, 272)

    return aux, wslab, wd


def decoder_layer(x, cos, sin, p):
    aux, wslab, wd = _prep(x, cos, sin, p)

    flops = 2 * BS * (H * W_QKVL_W + H * H + H * H2_W + NE * I * H) \
            + 4 * NH * BS * BS * HD
    cost = pl.CostEstimate(
        flops=int(flops),
        transcendentals=int(BS * (NH * BS + NE + NE * I)),
        bytes_accessed=int(aux.size * 4 + (wslab.size + wd.size) * 2 + BS * H * 4))

    vmem = lambda: pl.BlockSpec(memory_space=pltpu.MemorySpace.VMEM)
    out = pl.pallas_call(
        decoder_layer_kernel,
        out_shape=jax.ShapeDtypeStruct((BS, H), jnp.float32),
        in_specs=[vmem(), vmem(), vmem()],
        out_specs=vmem(),
        cost_estimate=cost,
    )(aux, wslab, wd)
    return out.reshape(B, S, H)


# ------------------- deterministic parameter init -------------------
def init_params(key):
    ks = jax.random.split(key, 10)
    std = 0.02
    return {
        "ln1": jnp.ones((1, H), jnp.float32),
        "ln2": jnp.ones((1, H), jnp.float32),
        "wq": std * jax.random.normal(ks[0], (H, H), jnp.float32),
        "wk": std * jax.random.normal(ks[1], (H, NKV * HD), jnp.float32),
        "wv": std * jax.random.normal(ks[2], (H, NKV * HD), jnp.float32),
        "wo": std * jax.random.normal(ks[3], (H, H), jnp.float32),
        "wtl": std * jax.random.normal(ks[4], (H, L), jnp.float32),
        "wfl": std * jax.random.normal(ks[5], (L, H), jnp.float32),
        "gate": jnp.ones((1, 1), jnp.float32),
        "wg": std * jax.random.normal(ks[6], (NE, H, I), jnp.float32),
        "wu": std * jax.random.normal(ks[7], (NE, H, I), jnp.float32),
        "wd": std * jax.random.normal(ks[8], (NE, I, H), jnp.float32),
        "wr": std * jax.random.normal(ks[9], (H, NE), jnp.float32),
    }


# ------------------- pure-JAX reference (mirrors torch code) -------------------
def _rotate_half(x):
    x1, x2 = jnp.split(x, 2, axis=-1)
    return jnp.concatenate([-x2, x1], axis=-1)


def reference(x, cos, sin, p):
    def rms(v, w):
        return v * lax.rsqrt(jnp.mean(v * v, -1, keepdims=True) + EPS) * w

    h1 = rms(x, p["ln1"][0])
    q = (h1 @ p["wq"]).reshape(B, S, NH, HD).transpose(0, 2, 1, 3)
    k = (h1 @ p["wk"]).reshape(B, S, NKV, HD).transpose(0, 2, 1, 3)
    v = (h1 @ p["wv"]).reshape(B, S, NKV, HD).transpose(0, 2, 1, 3)
    c, s = cos[None, None], sin[None, None]
    q = q * c + _rotate_half(q) * s
    k = k * c + _rotate_half(k) * s
    k = jnp.repeat(k, GROUP, axis=1)
    v = jnp.repeat(v, GROUP, axis=1)
    scores = jnp.einsum("bhqd,bhkd->bhqk", q, k) * SCALE
    w = jax.nn.softmax(scores, axis=-1)
    o = jnp.einsum("bhqk,bhkd->bhqd", w, v).transpose(0, 2, 1, 3).reshape(B, S, H)
    o = o @ p["wo"]
    latent = (h1 @ p["wtl"]) @ p["wfl"]
    res1 = x + o + p["gate"][0, 0] * latent

    h2 = rms(res1, p["ln2"][0])
    probs = jax.nn.softmax(h2 @ p["wr"], axis=-1)
    tw, ti = lax.top_k(probs, TOPK)
    tw = tw / jnp.sum(tw, -1, keepdims=True)
    moe = jnp.zeros_like(h2)
    for e in range(NE):
        g = h2 @ p["wg"][e]
        u = h2 @ p["wu"][e]
        d = (jax.nn.silu(g) * u) @ p["wd"][e]
        gw = jnp.sum(jnp.where(ti == e, tw, 0.0), axis=-1, keepdims=True)
        moe = moe + gw * d
    return res1 + moe


if __name__ == "__main__":
    key = jax.random.PRNGKey(0)
    kx, kp = jax.random.split(key)
    x = jax.random.normal(kx, (B, S, H), jnp.float32)

    pos = jnp.arange(S, dtype=jnp.float32)
    inv_freq = 1.0 / (10000.0 ** (jnp.arange(0, HD, 2, dtype=jnp.float32) / HD))
    freqs = pos[:, None] * inv_freq[None, :]
    emb = jnp.concatenate([freqs, freqs], axis=-1)      # (S, HD)
    cos, sin = jnp.cos(emb), jnp.sin(emb)

    params = init_params(kp)

    out = decoder_layer(x, cos, sin, params)
    out = jax.block_until_ready(out)

    ref = reference(x, cos, sin, params)
    np.testing.assert_allclose(np.asarray(out), np.asarray(ref), rtol=2e-2, atol=2e-2)
    print("KERNEL_OK")
</pallas_src>

<mosaic_0001>
module attributes {stable_mosaic.version = 11 : i64} {
  func.func @decoder_layer_kernel(%arg0: memref<16x272xf32, #tpu.memory_space<vmem>>, %arg1: memref<32x1792xbf16, #tpu.memory_space<vmem>>, %arg2: memref<576x32xbf16, #tpu.memory_space<vmem>>, %arg3: memref<16x32xf32, #tpu.memory_space<vmem>>) attributes {dimension_semantics = [], scalar_prefetch = 0 : i64, scratch_operands = 0 : i64, tpu.core_type = #tpu.core_type<tc>} {
    %c0 = arith.constant 0 : index
    %c0_0 = arith.constant 0 : index
    %0 = vector.load %arg0[%c0, %c0_0] : memref<16x272xf32, #tpu.memory_space<vmem>>, vector<16x32xf32>
    %c0_1 = arith.constant 0 : index
    %c128 = arith.constant 128 : index
    %1 = vector.load %arg0[%c0_1, %c128] : memref<16x272xf32, #tpu.memory_space<vmem>>, vector<16x64xf32>
    %c0_2 = arith.constant 0 : index
    %c192 = arith.constant 192 : index
    %2 = vector.load %arg0[%c0_2, %c192] : memref<16x272xf32, #tpu.memory_space<vmem>>, vector<16x64xf32>
    %c0_3 = arith.constant 0 : index
    %c256 = arith.constant 256 : index
    %3 = vector.load %arg0[%c0_3, %c256] : memref<16x272xf32, #tpu.memory_space<vmem>>, vector<16x16xf32>
    %4 = arith.mulf %0, %0 : vector<16x32xf32>
    %cst = arith.constant dense<0.000000e+00> : vector<16xf32>
    %5 = vector.multi_reduction <add>, %4, %cst [1] : vector<16x32xf32> to vector<16xf32>
    %6 = vector.shape_cast %5 : vector<16xf32> to vector<16x1xf32>
    %cst_4 = arith.constant 3.200000e+01 : f32
    %7 = vector.broadcast %cst_4 : f32 to vector<16x1xf32>
    %8 = arith.divf %6, %7 : vector<16x1xf32>
    %cst_5 = arith.constant 9.99999974E-6 : f32
    %9 = vector.broadcast %cst_5 : f32 to vector<16x1xf32>
    %10 = arith.addf %8, %9 : vector<16x1xf32>
    %11 = math.rsqrt %10 : vector<16x1xf32>
    %12 = vector.broadcast %11 : vector<16x1xf32> to vector<16x32xf32>
    %13 = arith.mulf %0, %12 : vector<16x32xf32>
    %14 = arith.truncf %13 : vector<16x32xf32> to vector<16x32xbf16>
    %c0_6 = arith.constant 0 : index
    %c0_7 = arith.constant 0 : index
    %15 = vector.load %arg1[%c0_6, %c0_7] : memref<32x1792xbf16, #tpu.memory_space<vmem>>, vector<32x192xbf16>
    %cst_8 = arith.constant dense<0.000000e+00> : vector<16x192xf32>
    %16 = tpu.matmul %14, %15, %cst_8 {dimension_numbers = #tpu.dot_dimension_numbers<[1], [0], [0], [1], [0, 0, 1, 1], [], []>} : vector<16x32xbf16>, vector<32x192xbf16>, vector<16x192xf32> -> vector<16x192xf32>
    %17 = vector.extract_strided_slice %16 {offsets = [0, 0], sizes = [16, 64], strides = [1, 1]} : vector<16x192xf32> to vector<16x64xf32>
    %18 = arith.mulf %17, %1 : vector<16x64xf32>
    %19 = vector.extract_strided_slice %16 {offsets = [0, 64], sizes = [16, 64], strides = [1, 1]} : vector<16x192xf32> to vector<16x64xf32>
    %20 = arith.mulf %19, %2 : vector<16x64xf32>
    %21 = arith.addf %18, %20 : vector<16x64xf32>
    %22 = vector.extract_strided_slice %16 {offsets = [0, 128], sizes = [16, 32], strides = [1, 1]} : vector<16x192xf32> to vector<16x32xf32>
    %23 = vector.extract_strided_slice %16 {offsets = [0, 160], sizes = [16, 32], strides = [1, 1]} : vector<16x192xf32> to vector<16x32xf32>
    %24 = vector.extract_strided_slice %21 {offsets = [0, 0], sizes = [16, 8], strides = [1, 1]} : vector<16x64xf32> to vector<16x8xf32>
    %25 = vector.extract_strided_slice %21 {offsets = [0, 32], sizes = [16, 8], strides = [1, 1]} : vector<16x64xf32> to vector<16x8xf32>
    %26 = vector.extract_strided_slice %22 {offsets = [0, 0], sizes = [16, 8], strides = [1, 1]} : vector<16x32xf32> to vector<16x8xf32>
    %cst_9 = arith.constant dense<0.000000e+00> : vector<16x16xf32>
    %27 = tpu.matmul %24, %25, %cst_9 {dimension_numbers = #tpu.dot_dimension_numbers<[1], [1], [0], [0], [0, 0, 1, 0], [], []>} : vector<16x8xf32>, vector<16x8xf32>, vector<16x16xf32> -> vector<16x16xf32>
    %cst_10 = arith.constant 0.353553385 : f32
    %28 = vector.broadcast %cst_10 : f32 to vector<16x16xf32>
    %29 = arith.mulf %27, %28 : vector<16x16xf32>
    %30 = arith.addf %29, %3 : vector<16x16xf32>
    %cst_11 = arith.constant dense<0xFF800000> : vector<16xf32>
    %31 = vector.multi_reduction <maximumf>, %30, %cst_11 [1] : vector<16x16xf32> to vector<16xf32>
    %32 = vector.shape_cast %31 : vector<16xf32> to vector<16x1xf32>
    %33 = vector.broadcast %32 : vector<16x1xf32> to vector<16x16xf32>
    %34 = arith.subf %30, %33 : vector<16x16xf32>
    %35 = math.exp %34 : vector<16x16xf32>
    %cst_12 = arith.constant dense<0.000000e+00> : vector<16xf32>
    %36 = vector.multi_reduction <add>, %35, %cst_12 [1] : vector<16x16xf32> to vector<16xf32>
    %37 = vector.shape_cast %36 : vector<16xf32> to vector<16x1xf32>
    %38 = tpu.reciprocal %37 {approx = true} : vector<16x1xf32> -> vector<16x1xf32>
    %39 = vector.broadcast %38 : vector<16x1xf32> to vector<16x16xf32>
    %40 = arith.mulf %35, %39 : vector<16x16xf32>
    %cst_13 = arith.constant dense<0.000000e+00> : vector<16x8xf32>
    %41 = tpu.matmul %40, %26, %cst_13 {dimension_numbers = #tpu.dot_dimension_numbers<[1], [0], [0], [1], [0, 0, 1, 1], [], []>} : vector<16x16xf32>, vector<16x8xf32>, vector<16x8xf32> -> vector<16x8xf32>
    %42 = vector.extract_strided_slice %21 {offsets = [0, 8], sizes = [16, 8], strides = [1, 1]} : vector<16x64xf32> to vector<16x8xf32>
    %43 = vector.extract_strided_slice %21 {offsets = [0, 40], sizes = [16, 8], strides = [1, 1]} : vector<16x64xf32> to vector<16x8xf32>
    %44 = vector.extract_strided_slice %22 {offsets = [0, 8], sizes = [16, 8], strides = [1, 1]} : vector<16x32xf32> to vector<16x8xf32>
    %cst_14 = arith.constant dense<0.000000e+00> : vector<16x16xf32>
    %45 = tpu.matmul %42, %43, %cst_14 {dimension_numbers = #tpu.dot_dimension_numbers<[1], [1], [0], [0], [0, 0, 1, 0], [], []>} : vector<16x8xf32>, vector<16x8xf32>, vector<16x16xf32> -> vector<16x16xf32>
    %cst_15 = arith.constant 0.353553385 : f32
    %46 = vector.broadcast %cst_15 : f32 to vector<16x16xf32>
    %47 = arith.mulf %45, %46 : vector<16x16xf32>
    %48 = arith.addf %47, %3 : vector<16x16xf32>
    %cst_16 = arith.constant dense<0xFF800000> : vector<16xf32>
    %49 = vector.multi_reduction <maximumf>, %48, %cst_16 [1] : vector<16x16xf32> to vector<16xf32>
    %50 = vector.shape_cast %49 : vector<16xf32> to vector<16x1xf32>
    %51 = vector.broadcast %50 : vector<16x1xf32> to vector<16x16xf32>
    %52 = arith.subf %48, %51 : vector<16x16xf32>
    %53 = math.exp %52 : vector<16x16xf32>
    %cst_17 = arith.constant dense<0.000000e+00> : vector<16xf32>
    %54 = vector.multi_reduction <add>, %53, %cst_17 [1] : vector<16x16xf32> to vector<16xf32>
    %55 = vector.shape_cast %54 : vector<16xf32> to vector<16x1xf32>
    %56 = tpu.reciprocal %55 {approx = true} : vector<16x1xf32> -> vector<16x1xf32>
    %57 = vector.broadcast %56 : vector<16x1xf32> to vector<16x16xf32>
    %58 = arith.mulf %53, %57 : vector<16x16xf32>
    %cst_18 = arith.constant dense<0.000000e+00> : vector<16x8xf32>
    %59 = tpu.matmul %58, %44, %cst_18 {dimension_numbers = #tpu.dot_dimension_numbers<[1], [0], [0], [1], [0, 0, 1, 1], [], []>} : vector<16x16xf32>, vector<16x8xf32>, vector<16x8xf32> -> vector<16x8xf32>
    %60 = vector.extract_strided_slice %21 {offsets = [0, 16], sizes = [16, 8], strides = [1, 1]} : vector<16x64xf32> to vector<16x8xf32>
    %61 = vector.extract_strided_slice %21 {offsets = [0, 48], sizes = [16, 8], strides = [1, 1]} : vector<16x64xf32> to vector<16x8xf32>
    %62 = vector.extract_strided_slice %22 {offsets = [0, 16], sizes = [16, 8], strides = [1, 1]} : vector<16x32xf32> to vector<16x8xf32>
    %cst_19 = arith.constant dense<0.000000e+00> : vector<16x16xf32>
    %63 = tpu.matmul %60, %61, %cst_19 {dimension_numbers = #tpu.dot_dimension_numbers<[1], [1], [0], [0], [0, 0, 1, 0], [], []>} : vector<16x8xf32>, vector<16x8xf32>, vector<16x16xf32> -> vector<16x16xf32>
    %cst_20 = arith.constant 0.353553385 : f32
    %64 = vector.broadcast %cst_20 : f32 to vector<16x16xf32>
    %65 = arith.mulf %63, %64 : vector<16x16xf32>
    %66 = arith.addf %65, %3 : vector<16x16xf32>
    %cst_21 = arith.constant dense<0xFF800000> : vector<16xf32>
    %67 = vector.multi_reduction <maximumf>, %66, %cst_21 [1] : vector<16x16xf32> to vector<16xf32>
    %68 = vector.shape_cast %67 : vector<16xf32> to vector<16x1xf32>
    %69 = vector.broadcast %68 : vector<16x1xf32> to vector<16x16xf32>
    %70 = arith.subf %66, %69 : vector<16x16xf32>
    %71 = math.exp %70 : vector<16x16xf32>
    %cst_22 = arith.constant dense<0.000000e+00> : vector<16xf32>
    %72 = vector.multi_reduction <add>, %71, %cst_22 [1] : vector<16x16xf32> to vector<16xf32>
    %73 = vector.shape_cast %72 : vector<16xf32> to vector<16x1xf32>
    %74 = tpu.reciprocal %73 {approx = true} : vector<16x1xf32> -> vector<16x1xf32>
    %75 = vector.broadcast %74 : vector<16x1xf32> to vector<16x16xf32>
    %76 = arith.mulf %71, %75 : vector<16x16xf32>
    %cst_23 = arith.constant dense<0.000000e+00> : vector<16x8xf32>
    %77 = tpu.matmul %76, %62, %cst_23 {dimension_numbers = #tpu.dot_dimension_numbers<[1], [0], [0], [1], [0, 0, 1, 1], [], []>} : vector<16x16xf32>, vector<16x8xf32>, vector<16x8xf32> -> vector<16x8xf32>
    %78 = vector.extract_strided_slice %21 {offsets = [0, 24], sizes = [16, 8], strides = [1, 1]} : vector<16x64xf32> to vector<16x8xf32>
    %79 = vector.extract_strided_slice %21 {offsets = [0, 56], sizes = [16, 8], strides = [1, 1]} : vector<16x64xf32> to vector<16x8xf32>
    %80 = vector.extract_strided_slice %22 {offsets = [0, 24], sizes = [16, 8], strides = [1, 1]} : vector<16x32xf32> to vector<16x8xf32>
    %cst_24 = arith.constant dense<0.000000e+00> : vector<16x16xf32>
    %81 = tpu.matmul %78, %79, %cst_24 {dimension_numbers = #tpu.dot_dimension_numbers<[1], [1], [0], [0], [0, 0, 1, 0], [], []>} : vector<16x8xf32>, vector<16x8xf32>, vector<16x16xf32> -> vector<16x16xf32>
    %cst_25 = arith.constant 0.353553385 : f32
    %82 = vector.broadcast %cst_25 : f32 to vector<16x16xf32>
    %83 = arith.mulf %81, %82 : vector<16x16xf32>
    %84 = arith.addf %83, %3 : vector<16x16xf32>
    %cst_26 = arith.constant dense<0xFF800000> : vector<16xf32>
    %85 = vector.multi_reduction <maximumf>, %84, %cst_26 [1] : vector<16x16xf32> to vector<16xf32>
    %86 = vector.shape_cast %85 : vector<16xf32> to vector<16x1xf32>
    %87 = vector.broadcast %86 : vector<16x1xf32> to vector<16x16xf32>
    %88 = arith.subf %84, %87 : vector<16x16xf32>
    %89 = math.exp %88 : vector<16x16xf32>
    %cst_27 = arith.constant dense<0.000000e+00> : vector<16xf32>
    %90 = vector.multi_reduction <add>, %89, %cst_27 [1] : vector<16x16xf32> to vector<16xf32>
    %91 = vector.shape_cast %90 : vector<16xf32> to vector<16x1xf32>
    %92 = tpu.reciprocal %91 {approx = true} : vector<16x1xf32> -> vector<16x1xf32>
    %93 = vector.broadcast %92 : vector<16x1xf32> to vector<16x16xf32>
    %94 = arith.mulf %89, %93 : vector<16x16xf32>
    %cst_28 = arith.constant dense<0.000000e+00> : vector<16x8xf32>
    %95 = tpu.matmul %94, %80, %cst_28 {dimension_numbers = #tpu.dot_dimension_numbers<[1], [0], [0], [1], [0, 0, 1, 1], [], []>} : vector<16x16xf32>, vector<16x8xf32>, vector<16x8xf32> -> vector<16x8xf32>
    %96 = tpu.concatenate %41, %59, %77, %95 in 1 : vector<16x8xf32>, vector<16x8xf32>, vector<16x8xf32>, vector<16x8xf32> -> vector<16x32xf32>
    %97 = arith.truncf %96 : vector<16x32xf32> to vector<16x32xbf16>
    %c0_29 = arith.constant 0 : index
    %c256_30 = arith.constant 256 : index
    %98 = vector.load %arg1[%c0_29, %c256_30] : memref<32x1792xbf16, #tpu.memory_space<vmem>>, vector<32x32xbf16>
    %cst_31 = arith.constant dense<0.000000e+00> : vector<16x32xf32>
    %99 = tpu.matmul %97, %98, %cst_31 {dimension_numbers = #tpu.dot_dimension_numbers<[1], [0], [0], [1], [0, 0, 1, 1], [], []>} : vector<16x32xbf16>, vector<32x32xbf16>, vector<16x32xf32> -> vector<16x32xf32>
    %100 = arith.addf %0, %99 : vector<16x32xf32>
    %101 = arith.addf %100, %23 : vector<16x32xf32>
    %102 = arith.mulf %101, %101 : vector<16x32xf32>
    %cst_32 = arith.constant dense<0.000000e+00> : vector<16xf32>
    %103 = vector.multi_reduction <add>, %102, %cst_32 [1] : vector<16x32xf32> to vector<16xf32>
    %104 = vector.shape_cast %103 : vector<16xf32> to vector<16x1xf32>
    %cst_33 = arith.constant 3.200000e+01 : f32
    %105 = vector.broadcast %cst_33 : f32 to vector<16x1xf32>
    %106 = arith.divf %104, %105 : vector<16x1xf32>
    %cst_34 = arith.constant 9.99999974E-6 : f32
    %107 = vector.broadcast %cst_34 : f32 to vector<16x1xf32>
    %108 = arith.addf %106, %107 : vector<16x1xf32>
    %109 = math.rsqrt %108 : vector<16x1xf32>
    %110 = vector.broadcast %109 : vector<16x1xf32> to vector<16x32xf32>
    %111 = arith.mulf %101, %110 : vector<16x32xf32>
    %112 = arith.truncf %111 : vector<16x32xf32> to vector<16x32xbf16>
    %c0_35 = arith.constant 0 : index
    %c384 = arith.constant 384 : index
    %113 = vector.load %arg1[%c0_35, %c384] : memref<32x1792xbf16, #tpu.memory_space<vmem>>, vector<32x1408xbf16>
    %cst_36 = arith.constant dense<0.000000e+00> : vector<16x1408xf32>
    %114 = tpu.matmul %112, %113, %cst_36 {dimension_numbers = #tpu.dot_dimension_numbers<[1], [0], [0], [1], [0, 0, 1, 1], [], []>} : vector<16x32xbf16>, vector<32x1408xbf16>, vector<16x1408xf32> -> vector<16x1408xf32>
    %115 = vector.extract_strided_slice %114 {offsets = [0, 0], sizes = [16, 576], strides = [1, 1]} : vector<16x1408xf32> to vector<16x576xf32>
    %116 = vector.extract_strided_slice %114 {offsets = [0, 640], sizes = [16, 576], strides = [1, 1]} : vector<16x1408xf32> to vector<16x576xf32>
    %117 = vector.extract_strided_slice %114 {offsets = [0, 1280], sizes = [16, 9], strides = [1, 1]} : vector<16x1408xf32> to vector<16x9xf32>
    %cst_37 = arith.constant dense<0xFF800000> : vector<16xf32>
    %118 = vector.multi_reduction <maximumf>, %117, %cst_37 [1] : vector<16x9xf32> to vector<16xf32>
    %119 = vector.shape_cast %118 : vector<16xf32> to vector<16x1xf32>
    %120 = vector.broadcast %119 : vector<16x1xf32> to vector<16x9xf32>
    %121 = arith.subf %117, %120 : vector<16x9xf32>
    %122 = math.exp %121 : vector<16x9xf32>
    %cst_38 = arith.constant dense<0.000000e+00> : vector<16xf32>
    %123 = vector.multi_reduction <add>, %122, %cst_38 [1] : vector<16x9xf32> to vector<16xf32>
    %124 = vector.shape_cast %123 : vector<16xf32> to vector<16x1xf32>
    %125 = tpu.reciprocal %124 {approx = true} : vector<16x1xf32> -> vector<16x1xf32>
    %126 = vector.broadcast %125 : vector<16x1xf32> to vector<16x9xf32>
    %127 = arith.mulf %122, %126 : vector<16x9xf32>
    %128 = tpu.iota {dimensions = array<i32: 1>} : vector<16x9xi32>
    %cst_39 = arith.constant dense<0xFF800000> : vector<16xf32>
    %129 = vector.multi_reduction <maximumf>, %127, %cst_39 [1] : vector<16x9xf32> to vector<16xf32>
    %130 = vector.shape_cast %129 : vector<16xf32> to vector<16x1xf32>
    %131 = vector.broadcast %130 : vector<16x1xf32> to vector<16x9xf32>
    %132 = arith.cmpf oeq, %127, %131 : vector<16x9xf32>
    %c9_i32 = arith.constant 9 : i32
    %133 = vector.broadcast %c9_i32 : i32 to vector<16x9xi32>
    %134 = arith.select %132, %128, %133 : vector<16x9xi1>, vector<16x9xi32>
    %cst_40 = arith.constant dense<2147483647> : vector<16xi32>
    %135 = vector.multi_reduction <minsi>, %134, %cst_40 [1] : vector<16x9xi32> to vector<16xi32>
    %136 = vector.shape_cast %135 : vector<16xi32> to vector<16x1xi32>
    %137 = vector.broadcast %136 : vector<16x1xi32> to vector<16x9xi32>
    %138 = arith.cmpi eq, %128, %137 : vector<16x9xi32>
    %cst_41 = arith.constant -1.000000e+00 : f32
    %139 = vector.broadcast %cst_41 : f32 to vector<16x9xf32>
    %140 = arith.select %138, %139, %127 : vector<16x9xi1>, vector<16x9xf32>
    %cst_42 = arith.constant dense<0xFF800000> : vector<16xf32>
    %141 = vector.multi_reduction <maximumf>, %140, %cst_42 [1] : vector<16x9xf32> to vector<16xf32>
    %142 = vector.shape_cast %141 : vector<16xf32> to vector<16x1xf32>
    %143 = vector.broadcast %142 : vector<16x1xf32> to vector<16x9xf32>
    %144 = arith.cmpf oeq, %140, %143 : vector<16x9xf32>
    %c9_i32_43 = arith.constant 9 : i32
    %145 = vector.broadcast %c9_i32_43 : i32 to vector<16x9xi32>
    %146 = arith.select %144, %128, %145 : vector<16x9xi1>, vector<16x9xi32>
    %cst_44 = arith.constant dense<2147483647> : vector<16xi32>
    %147 = vector.multi_reduction <minsi>, %146, %cst_44 [1] : vector<16x9xi32> to vector<16xi32>
    %148 = vector.shape_cast %147 : vector<16xi32> to vector<16x1xi32>
    %149 = arith.addf %130, %142 : vector<16x1xf32>
    %150 = tpu.reciprocal %149 {approx = true} : vector<16x1xf32> -> vector<16x1xf32>
    %151 = arith.mulf %130, %150 : vector<16x1xf32>
    %152 = arith.mulf %142, %150 : vector<16x1xf32>
    %153 = tpu.iota {dimensions = array<i32: 1>} : vector<16x576xi32>
    %c64_i32 = arith.constant 64 : i32
    %154 = vector.broadcast %c64_i32 : i32 to vector<16x1xi32>
    %155 = arith.muli %136, %154 : vector<16x1xi32>
    %c64_i32_45 = arith.constant 64 : i32
    %156 = vector.broadcast %c64_i32_45 : i32 to vector<16x1xi32>
    %157 = arith.muli %148, %156 : vector<16x1xi32>
    %158 = vector.broadcast %155 : vector<16x1xi32> to vector<16x576xi32>
    %159 = arith.cmpi sge, %153, %158 : vector<16x576xi32>
    %c64_i32_46 = arith.constant 64 : i32
    %160 = vector.broadcast %c64_i32_46 : i32 to vector<16x1xi32>
    %161 = arith.addi %155, %160 : vector<16x1xi32>
    %162 = vector.broadcast %161 : vector<16x1xi32> to vector<16x576xi32>
    %163 = arith.cmpi slt, %153, %162 : vector<16x576xi32>
    %164 = arith.andi %159, %163 : vector<16x576xi1>
    %cst_47 = arith.constant 0.000000e+00 : f32
    %165 = vector.shape_cast %151 : vector<16x1xf32> to vector<16x1xf32>
    %166 = vector.broadcast %165 : vector<16x1xf32> to vector<16x576xf32>
    %167 = vector.broadcast %cst_47 : f32 to vector<16x576xf32>
    %168 = arith.select %164, %166, %167 : vector<16x576xi1>, vector<16x576xf32>
    %169 = vector.broadcast %157 : vector<16x1xi32> to vector<16x576xi32>
    %170 = arith.cmpi sge, %153, %169 : vector<16x576xi32>
    %c64_i32_48 = arith.constant 64 : i32
    %171 = vector.broadcast %c64_i32_48 : i32 to vector<16x1xi32>
    %172 = arith.addi %157, %171 : vector<16x1xi32>
    %173 = vector.broadcast %172 : vector<16x1xi32> to vector<16x576xi32>
    %174 = arith.cmpi slt, %153, %173 : vector<16x576xi32>
    %175 = arith.andi %170, %174 : vector<16x576xi1>
    %cst_49 = arith.constant 0.000000e+00 : f32
    %176 = vector.shape_cast %152 : vector<16x1xf32> to vector<16x1xf32>
    %177 = vector.broadcast %176 : vector<16x1xf32> to vector<16x576xf32>
    %178 = vector.broadcast %cst_49 : f32 to vector<16x576xf32>
    %179 = arith.select %175, %177, %178 : vector<16x576xi1>, vector<16x576xf32>
    %180 = arith.addf %168, %179 : vector<16x576xf32>
    %cst_50 = arith.constant 0.000000e+00 : f32
    %181 = vector.broadcast %cst_50 : f32 to vector<16x576xf32>
    %182 = arith.subf %181, %115 : vector<16x576xf32>
    %183 = math.exp %182 : vector<16x576xf32>
    %cst_51 = arith.constant 1.000000e+00 : f32
    %184 = vector.broadcast %cst_51 : f32 to vector<16x576xf32>
    %185 = arith.addf %184, %183 : vector<16x576xf32>
    %186 = tpu.reciprocal %185 {approx = true} : vector<16x576xf32> -> vector<16x576xf32>
    %187 = arith.mulf %115, %186 : vector<16x576xf32>
    %188 = arith.mulf %187, %116 : vector<16x576xf32>
    %189 = arith.mulf %188, %180 : vector<16x576xf32>
    %190 = arith.truncf %189 : vector<16x576xf32> to vector<16x576xbf16>
    %c0_52 = arith.constant 0 : index
    %c0_53 = arith.constant 0 : index
    %191 = vector.load %arg2[%c0_52, %c0_53] : memref<576x32xbf16, #tpu.memory_space<vmem>>, vector<576x32xbf16>
    %cst_54 = arith.constant dense<0.000000e+00> : vector<16x32xf32>
    %192 = tpu.matmul %190, %191, %cst_54 {dimension_numbers = #tpu.dot_dimension_numbers<[1], [0], [0], [1], [0, 0, 1, 1], [], []>} : vector<16x576xbf16>, vector<576x32xbf16>, vector<16x32xf32> -> vector<16x32xf32>
    %193 = arith.addf %101, %192 : vector<16x32xf32>
    %c0_55 = arith.constant 0 : index
    %c0_56 = arith.constant 0 : index
    %194 = vector.load %arg3[%c0_55, %c0_56] : memref<16x32xf32, #tpu.memory_space<vmem>>, vector<16x32xf32>
    tpu.vector_store %arg3[%c0_55, %c0_56], %193 {strides = array<i32>} : memref<16x32xf32, #tpu.memory_space<vmem>>, vector<16x32xf32>,
    return
  }
}

</mosaic_0001>

<llo_original>
// kernel: tpu_custom_call.1
$region0: #{tpu_custom_call.1}
  #allocation0 [shape = 'u32[]', space=smem, size = 0x4, offset = 0x4, fixed_abs, tag = 'smem constant byte address 0x4 - core index']
  #allocation1 [shape = 'u32[144,128]{1,0:T(1,128)}', space=vmem, size = 0x12000, scoped, tag = 'internal scratch']
  %s0 = inlined_call_operand.vmem [shape: f32[16,272], index: 0, kind: input, shape index: {}]
  %s1 = inlined_call_operand.vmem [shape: bf16[32,1792], index: 1, kind: input, shape index: {}]
  %s2 = inlined_call_operand.vmem [shape: bf16[576,32], index: 2, kind: input, shape index: {}]
  %s3 = inlined_call_operand.hbm [shape: f32[16,32], index: 3, kind: output, shape index: {}]
  %s4 = sld [smem:[#allocation0]]
  $region22: #{tpu_custom_call.1} parent=0
    _
  %s6 = ssub.s32 1, %s4
  %s7 = scalar_select 0, %s6, %s4
  $region1: #{tpu_custom_call.1} parent=0
    #allocation2 [shape = 'u8[8192]{0}', space=vmem, size = 0x2000, scoped, tag = 'output window, operand 0, single buffered']
    #allocation3 [shape = 's32[1]{0}', space=sflag, size = 0x4, scoped, tag = 'scoped memory for tpu_custom_call.1']
    %8 = vsyncpa [#allocation3], 0
    // Predicated region
    $region2: #{tpu_custom_call.1} parent=1 // pred_check
      _
    $region3: #{tpu_custom_call.1} parent=1 // pred_check_branch
      %10 = sbr.rel (0) target = $region5
    $region4: #{tpu_custom_call.1} parent=1 // pred_region
      _
    $region5: #{tpu_custom_call.1} parent=1 // pred_fallthru
      _
    // Predicated region
    $region6: #{tpu_custom_call.1} parent=1 // pred_check
      _
    $region7: #{tpu_custom_call.1} parent=1 // pred_check_branch
      %12 = sbr.rel (0) target = $region9
    $region8: #{tpu_custom_call.1} parent=1 // pred_region
      _
    $region9: #{tpu_custom_call.1} parent=1 // pred_fallthru
      _
    // Predicated region
    $region10: #{tpu_custom_call.1} parent=1 // pred_check
      _
    $region11: #{tpu_custom_call.1} parent=1 // pred_check_branch
      %14 = sbr.rel (0) target = $region13
    $region12: #{tpu_custom_call.1} parent=1 // pred_region
      _
    $region13: #{tpu_custom_call.1} parent=1 // pred_fallthru
      _
    %v16 = vld [vmem:[%s0] sm:$0xff]
    %v17 = vld [vmem:[%s0 + $0x18] sm:$0xff]
    %v18 = vld [vmem:[%s0 + $0x8] sm:$0xff]
    %v19 = vld [vmem:[%s0 + $0x20] sm:$0xff]
    %v20 = vld [vmem:[%s0 + $0x10] sm:$0xff]
    %v21 = vld [vmem:[%s0 + $0x28] sm:$0xff]
    %v22 = vmul.f32 %v16, %v16
    %v23 = vmul.f32 %v17, %v17
    %vm24 = vcmask 261120
    %v25 = vsel %vm24, %v22, 0.0
    %26 = vadd.xlane.f32.xlu0 %v25
    %v27 = vpop.xlane.xlu0 %26
    %v28 = vsel %vm24, %v23, 0.0
    %29 = vadd.xlane.f32.xlu0 %v28
    %v30 = vpop.xlane.xlu0 %29
    %v31 = vrcp.pop 32.0
    %v32 = vmul.f32 %v27, %v31
    %v33 = vmul.f32 %v30, %v31
    %v34 = vadd.f32 %v32, 1e-05
    %v35 = vadd.f32 %v33, 1e-05
    %v36 = vrsqrt.pop %v34
    %v37 = vrsqrt.pop %v35
    %v38 = vmul.f32 %v16, %v36
    %v39 = vmul.f32 %v17, %v37
    %v40 = vpack.c.bf16 %v39, %v38
    %v41 = vld [vmem:[%s1] sm:$0xff]
    %v42 = vld [vmem:[%s1 + $0x38] sm:$0xff]
    %v43 = vld [vmem:[%s1 + $0x70] sm:$0xff]
    %v44 = vld [vmem:[%s1 + $0xa8] sm:$0xff]
    %v49 = vunpack.c.l.b16 %v41
    %v50 = vunpack.c.h.b16 %v41
    %v51 = vunpack.c.l.b16 %v42
    %v52 = vunpack.c.h.b16 %v42
    %v53 = vunpack.c.l.b16 %v43
    %v54 = vunpack.c.h.b16 %v43
    %v55 = vunpack.c.l.b16 %v44
    %v56 = vunpack.c.h.b16 %v44
    %v57 = vpack.c.b16 %v51, %v49
    %v58 = vpack.c.b16 %v52, %v50
    %v59 = vpack.c.b16 %v55, %v53
    %v60 = vpack.c.b16 %v56, %v54
    %v66 = vsel %vm24, %v40, 0
    %68 = vmatprep.subr.bf16.mxu0 %v58
    %69 = vmatpush1.bf16.msra.mxu0 %v57
    %70 = vmatprep.subr.bf16.mxu0 %v60
    %71 = vmatpush1.bf16.msra.mxu0 %v59
    %72 = vmatprep.subr.bf16.mxu0 0
    %73 = vmatpush1.bf16.msra.mxu0 0
    %74 = vmatprep.subr.bf16.mxu0 0
    %75 = vmatpush1.bf16.msra.mxu0 0
    %76 = vmatprep.subr.bf16.mxu0 0
    %77 = vmatpush1.bf16.msra.mxu0 0
    %78 = vmatprep.subr.bf16.mxu0 0
    %79 = vmatpush1.bf16.msra.mxu0 0
    %80 = vmatprep.subr.bf16.mxu0 0
    %81 = vmatpush1.bf16.msra.mxu0 0
    %82 = vmatprep.subr.bf16.mxu0 0
    %83 = vmatpush1.bf16.msra.mxu0 0
    %84 = vmatprep.subr.bf16.mxu0 0
    %85 = vmatpush1.bf16.msra.mxu0 0
    %86 = vmatprep.subr.bf16.mxu0 0
    %87 = vmatpush1.bf16.msra.mxu0 0
    %88 = vmatprep.subr.bf16.mxu0 0
    %89 = vmatpush1.bf16.msra.mxu0 0
    %90 = vmatprep.subr.bf16.mxu0 0
    %91 = vmatpush1.bf16.msra.mxu0 0
    %92 = vmatprep.subr.bf16.mxu0 0
    %93 = vmatpush1.bf16.msra.mxu0 0
    %94 = vmatprep.subr.bf16.mxu0 0
    %95 = vmatpush1.bf16.msra.mxu0 0
    %96 = vmatprep.subr.bf16.mxu0 0
    %97 = vmatpush1.bf16.msra.mxu0 0
    %98 = vmatprep.subr.bf16.mxu0 0
    %99 = vmatpush1.bf16.msra.mxu0 0
    %100 = vmatprep.mubr.bf16.mxu0 0
    %101 = vmatmul.mubr.bf16.gmra.mrb[0].mxu0 %v66
    %v102 = vpop.f32.mrb[0].mxu0
    %v103 = vadd.f32 0.0, %v102
    %v104 = vpop.f32.mrb[0].mxu0
    %v105 = vadd.f32 0.0, %v104
    %v106 = vpop.f32.mrb[0].mxu0
    %v107 = vadd.f32 0.0, %v106
    %v108 = vpop.f32.mrb[0].mxu0
    %v109 = vadd.f32 0.0, %v108
    %110 = vdwg.mxu0
    %v111 = vmul.f32 %v103, %v18
    %v112 = vmul.f32 %v107, %v19
    %115 = vrot.lane.b32.xlu0 %v111, 64
    %v116 = vpop.permute.xlu0 %115
    %117 = vrot.lane.b32.xlu0 %v112, 64
    %v118 = vpop.permute.xlu0 %117
    %v121 = vadd.f32 %v111, %v116
    %v122 = vadd.f32 %v112, %v118
    %125 = vrot.lane.b32.xlu0 %v121, 96
    %v126 = vpop.permute.xlu0 %125
    %127 = vrot.lane.b32.xlu0 %v122, 96
    %v128 = vpop.permute.xlu0 %127
    %vm129 = vcmask 64512
    %v130 = vsel %vm129, %v121, 0
    %v132 = vsel %vm129, %v122, 0
    %v134 = vsel %vm129, %v126, 0
    %v136 = vsel %vm129, %v128, 0
    %138 = vmatprep.subr.mxu0 0.0
    %139 = vmatpush1.xpose.msra.mxu0 %v134
    %140 = vmatprep.subr.mxu0 0.0
    %141 = vmatpush1.xpose.msra.mxu0 %v136
    %142 = vmatprep.subr.mxu0 0.0
    %143 = vmatpush1.xpose.msra.mxu0 0.0
    %144 = vmatprep.subr.mxu0 0.0
    %145 = vmatpush1.xpose.msra.mxu0 0.0
    %146 = vmatprep.subr.mxu0 0.0
    %147 = vmatpush1.xpose.msra.mxu0 0.0
    %148 = vmatprep.subr.mxu0 0.0
    %149 = vmatpush1.xpose.msra.mxu0 0.0
    %150 = vmatprep.subr.mxu0 0.0
    %151 = vmatpush1.xpose.msra.mxu0 0.0
    %152 = vmatprep.subr.mxu0 0.0
    %153 = vmatpush1.xpose.msra.mxu0 0.0
    %154 = vmatprep.subr.mxu0 0.0
    %155 = vmatpush1.xpose.msra.mxu0 0.0
    %156 = vmatprep.subr.mxu0 0.0
    %157 = vmatpush1.xpose.msra.mxu0 0.0
    %158 = vmatprep.subr.mxu0 0.0
    %159 = vmatpush1.xpose.msra.mxu0 0.0
    %160 = vmatprep.subr.mxu0 0.0
    %161 = vmatpush1.xpose.msra.mxu0 0.0
    %162 = vmatprep.subr.mxu0 0.0
    %163 = vmatpush1.xpose.msra.mxu0 0.0
    %164 = vmatprep.subr.mxu0 0.0
    %165 = vmatpush1.xpose.msra.mxu0 0.0
    %166 = vmatprep.subr.mxu0 0.0
    %167 = vmatpush1.xpose.msra.mxu0 0.0
    %168 = vmatprep.subr.mxu0 0.0
    %169 = vmatpush1.xpose.msra.mxu0 0.0
    %170 = vmatprep.subr.mxu0 0.0
    %171 = vmatpush1.xpose.msra.mxu0 0.0
    %172 = vmatprep.subr.mxu0 0.0
    %173 = vmatpush1.xpose.msra.mxu0 0.0
    %174 = vmatprep.subr.mxu0 0.0
    %175 = vmatpush1.xpose.msra.mxu0 0.0
    %176 = vmatprep.subr.mxu0 0.0
    %177 = vmatpush1.xpose.msra.mxu0 0.0
    %178 = vmatprep.subr.mxu0 0.0
    %179 = vmatpush1.xpose.msra.mxu0 0.0
    %180 = vmatprep.subr.mxu0 0.0
    %181 = vmatpush1.xpose.msra.mxu0 0.0
    %182 = vmatprep.subr.mxu0 0.0
    %183 = vmatpush1.xpose.msra.mxu0 0.0
    %184 = vmatprep.subr.mxu0 0.0
    %185 = vmatpush1.xpose.msra.mxu0 0.0
    %186 = vmatprep.subr.mxu0 0.0
    %187 = vmatpush1.xpose.msra.mxu0 0.0
    %188 = vmatprep.subr.mxu0 0.0
    %189 = vmatpush1.xpose.msra.mxu0 0.0
    %190 = vmatprep.subr.mxu0 0.0
    %191 = vmatpush1.xpose.msra.mxu0 0.0
    %192 = vmatprep.subr.mxu0 0.0
    %193 = vmatpush1.xpose.msra.mxu0 0.0
    %194 = vmatprep.subr.mxu0 0.0
    %195 = vmatpush1.xpose.msra.mxu0 0.0
    %196 = vmatprep.subr.mxu0 0.0
    %197 = vmatpush1.xpose.msra.mxu0 0.0
    %198 = vmatprep.subr.mxu0 0.0
    %199 = vmatpush1.xpose.msra.mxu0 0.0
    %200 = vmatprep.subr.mxu0 0.0
    %201 = vmatpush1.xpose.msra.mxu0 0.0
    %202 = vmatprep.mubr.f32.mxu0 0.0
    %203 = vmatmul.mubr.f32.gmra.mrb[0].mxu0 %v130
    %v204 = vpop.f32.mrb[0].mxu0
    %v205 = vadd.f32 0.0, %v204
    %v206 = vpop.f32.mrb[0].mxu0
    %207 = vmatprep.mubr.f32.mxu0 0.0
    %208 = vmatmul.mubr.f32.gmra.mrb[0].mxu0 %v132
    %v209 = vpop.f32.mrb[0].mxu0
    %v210 = vadd.f32 0.0, %v209
    %v211 = vpop.f32.mrb[0].mxu0
    %212 = vdwg.mxu0
    %v213 = vmul.f32 %v205, 0.35355338
    %v214 = vmul.f32 %v210, 0.35355338
    %v215 = vadd.f32 %v213, %v20
    %v216 = vadd.f32 %v214, %v21
    %vm217 = vcmask 130048
    %v218 = vsel %vm217, %v215, -inf
    %219 = vmax.xlane.f32.xlu0 %v218
    %v220 = vpop.xlane.xlu0 %219
    %v221 = vsel %vm217, %v216, -inf
    %222 = vmax.xlane.f32.xlu0 %v221
    %v223 = vpop.xlane.xlu0 %222
    %v224 = vsub.f32 %v215, %v220
    %v225 = vsub.f32 %v216, %v223
    %v226 = vmul.f32 %v224, 1.442695
    %v227 = vpow.pop %v226
    %v228 = vmul.f32 %v225, 1.442695
    %v229 = vpow.pop %v228
    %v230 = vsel %vm217, %v227, 0.0
    %231 = vadd.xlane.f32.xlu0 %v230
    %v232 = vpop.xlane.xlu0 %231
    %v233 = vsel %vm217, %v229, 0.0
    %234 = vadd.xlane.f32.xlu0 %v233
    %v235 = vpop.xlane.xlu0 %234
    %v236 = vrcp.pop %v232
    %v237 = vrcp.pop %v235
    %v238 = vmul.f32 %v227, %v236
    %v239 = vmul.f32 %v229, %v237
    %v241 = vsel %vm217, %v238, 0
    %v244 = vsel %vm217, %v239, 0
    %246 = vmatprep.subr.mxu0 0.0
    %247 = vmatpush1.msra.mxu0 %v105
    %248 = vmatprep.subr.mxu0 0.0
    %249 = vmatpush1.msra.mxu0 %v109
    %250 = vmatprep.subr.mxu0 0.0
    %251 = vmatpush1.msra.mxu0 0.0
    %252 = vmatprep.subr.mxu0 0.0
    %253 = vmatpush1.msra.mxu0 0.0
    %254 = vmatprep.subr.mxu0 0.0
    %255 = vmatpush1.msra.mxu0 0.0
    %256 = vmatprep.subr.mxu0 0.0
    %257 = vmatpush1.msra.mxu0 0.0
    %258 = vmatprep.subr.mxu0 0.0
    %259 = vmatpush1.msra.mxu0 0.0
    %260 = vmatprep.subr.mxu0 0.0
    %261 = vmatpush1.msra.mxu0 0.0
    %262 = vmatprep.subr.mxu0 0.0
    %263 = vmatpush1.msra.mxu0 0.0
    %264 = vmatprep.subr.mxu0 0.0
    %265 = vmatpush1.msra.mxu0 0.0
    %266 = vmatprep.subr.mxu0 0.0
    %267 = vmatpush1.msra.mxu0 0.0
    %268 = vmatprep.subr.mxu0 0.0
    %269 = vmatpush1.msra.mxu0 0.0
    %270 = vmatprep.subr.mxu0 0.0
    %271 = vmatpush1.msra.mxu0 0.0
    %272 = vmatprep.subr.mxu0 0.0
    %273 = vmatpush1.msra.mxu0 0.0
    %274 = vmatprep.subr.mxu0 0.0
    %275 = vmatpush1.msra.mxu0 0.0
    %276 = vmatprep.subr.mxu0 0.0
    %277 = vmatpush1.msra.mxu0 0.0
    %278 = vmatprep.subr.mxu0 0.0
    %279 = vmatpush1.msra.mxu0 0.0
    %280 = vmatprep.subr.mxu0 0.0
    %281 = vmatpush1.msra.mxu0 0.0
    %282 = vmatprep.subr.mxu0 0.0
    %283 = vmatpush1.msra.mxu0 0.0
    %284 = vmatprep.subr.mxu0 0.0
    %285 = vmatpush1.msra.mxu0 0.0
    %286 = vmatprep.subr.mxu0 0.0
    %287 = vmatpush1.msra.mxu0 0.0
    %288 = vmatprep.subr.mxu0 0.0
    %289 = vmatpush1.msra.mxu0 0.0
    %290 = vmatprep.subr.mxu0 0.0
    %291 = vmatpush1.msra.mxu0 0.0
    %292 = vmatprep.subr.mxu0 0.0
    %293 = vmatpush1.msra.mxu0 0.0
    %294 = vmatprep.subr.mxu0 0.0
    %295 = vmatpush1.msra.mxu0 0.0
    %296 = vmatprep.subr.mxu0 0.0
    %297 = vmatpush1.msra.mxu0 0.0
    %298 = vmatprep.subr.mxu0 0.0
    %299 = vmatpush1.msra.mxu0 0.0
    %300 = vmatprep.subr.mxu0 0.0
    %301 = vmatpush1.msra.mxu0 0.0
    %302 = vmatprep.subr.mxu0 0.0
    %303 = vmatpush1.msra.mxu0 0.0
    %304 = vmatprep.subr.mxu0 0.0
    %305 = vmatpush1.msra.mxu0 0.0
    %306 = vmatprep.subr.mxu0 0.0
    %307 = vmatpush1.msra.mxu0 0.0
    %308 = vmatprep.subr.mxu0 0.0
    %309 = vmatpush1.msra.mxu0 0.0
    %310 = vmatprep.mubr.f32.mxu0 0.0
    %311 = vmatmul.mubr.f32.gmra.mrb[0].mxu0 %v241
    %v312 = vpop.f32.mrb[0].mxu0
    %v313 = vadd.f32 0.0, %v312
    %v314 = vpop.f32.mrb[0].mxu0
    %315 = vmatprep.mubr.f32.mxu0 0.0
    %316 = vmatmul.mubr.f32.gmra.mrb[0].mxu0 %v244
    %v317 = vpop.f32.mrb[0].mxu0
    %v318 = vadd.f32 0.0, %v317
    %v319 = vpop.f32.mrb[0].mxu0
    %320 = vdwg.mxu0
    %321 = vrot.lane.b32.xlu0 %v121, 120
    %v322 = vpop.permute.xlu0 %321
    %323 = vrot.lane.b32.xlu0 %v122, 120
    %v324 = vpop.permute.xlu0 %323
    %325 = vrot.lane.b32.xlu0 %v121, 88
    %v326 = vpop.permute.xlu0 %325
    %327 = vrot.lane.b32.xlu0 %v122, 88
    %v328 = vpop.permute.xlu0 %327
    %v329 = vsel %vm129, %v322, 0
    %v331 = vsel %vm129, %v324, 0
    %v333 = vsel %vm129, %v326, 0
    %v335 = vsel %vm129, %v328, 0
    %337 = vmatprep.subr.mxu0 0.0
    %338 = vmatpush1.xpose.msra.mxu0 %v333
    %339 = vmatprep.subr.mxu0 0.0
    %340 = vmatpush1.xpose.msra.mxu0 %v335
    %341 = vmatprep.subr.mxu0 0.0
    %342 = vmatpush1.xpose.msra.mxu0 0.0
    %343 = vmatprep.subr.mxu0 0.0
    %344 = vmatpush1.xpose.msra.mxu0 0.0
    %345 = vmatprep.subr.mxu0 0.0
    %346 = vmatpush1.xpose.msra.mxu0 0.0
    %347 = vmatprep.subr.mxu0 0.0
    %348 = vmatpush1.xpose.msra.mxu0 0.0
    %349 = vmatprep.subr.mxu0 0.0
    %350 = vmatpush1.xpose.msra.mxu0 0.0
    %351 = vmatprep.subr.mxu0 0.0
    %352 = vmatpush1.xpose.msra.mxu0 0.0
    %353 = vmatprep.subr.mxu0 0.0
    %354 = vmatpush1.xpose.msra.mxu0 0.0
    %355 = vmatprep.subr.mxu0 0.0
    %356 = vmatpush1.xpose.msra.mxu0 0.0
    %357 = vmatprep.subr.mxu0 0.0
    %358 = vmatpush1.xpose.msra.mxu0 0.0
    %359 = vmatprep.subr.mxu0 0.0
    %360 = vmatpush1.xpose.msra.mxu0 0.0
    %361 = vmatprep.subr.mxu0 0.0
    %362 = vmatpush1.xpose.msra.mxu0 0.0
    %363 = vmatprep.subr.mxu0 0.0
    %364 = vmatpush1.xpose.msra.mxu0 0.0
    %365 = vmatprep.subr.mxu0 0.0
    %366 = vmatpush1.xpose.msra.mxu0 0.0
    %367 = vmatprep.subr.mxu0 0.0
    %368 = vmatpush1.xpose.msra.mxu0 0.0
    %369 = vmatprep.subr.mxu0 0.0
    %370 = vmatpush1.xpose.msra.mxu0 0.0
    %371 = vmatprep.subr.mxu0 0.0
    %372 = vmatpush1.xpose.msra.mxu0 0.0
    %373 = vmatprep.subr.mxu0 0.0
    %374 = vmatpush1.xpose.msra.mxu0 0.0
    %375 = vmatprep.subr.mxu0 0.0
    %376 = vmatpush1.xpose.msra.mxu0 0.0
    %377 = vmatprep.subr.mxu0 0.0
    %378 = vmatpush1.xpose.msra.mxu0 0.0
    %379 = vmatprep.subr.mxu0 0.0
    %380 = vmatpush1.xpose.msra.mxu0 0.0
    %381 = vmatprep.subr.mxu0 0.0
    %382 = vmatpush1.xpose.msra.mxu0 0.0
    %383 = vmatprep.subr.mxu0 0.0
    %384 = vmatpush1.xpose.msra.mxu0 0.0
    %385 = vmatprep.subr.mxu0 0.0
    %386 = vmatpush1.xpose.msra.mxu0 0.0
    %387 = vmatprep.subr.mxu0 0.0
    %388 = vmatpush1.xpose.msra.mxu0 0.0
    %389 = vmatprep.subr.mxu0 0.0
    %390 = vmatpush1.xpose.msra.mxu0 0.0
    %391 = vmatprep.subr.mxu0 0.0
    %392 = vmatpush1.xpose.msra.mxu0 0.0
    %393 = vmatprep.subr.mxu0 0.0
    %394 = vmatpush1.xpose.msra.mxu0 0.0
    %395 = vmatprep.subr.mxu0 0.0
    %396 = vmatpush1.xpose.msra.mxu0 0.0
    %397 = vmatprep.subr.mxu0 0.0
    %398 = vmatpush1.xpose.msra.mxu0 0.0
    %399 = vmatprep.subr.mxu0 0.0
    %400 = vmatpush1.xpose.msra.mxu0 0.0
    %401 = vmatprep.mubr.f32.mxu0 0.0
    %402 = vmatmul.mubr.f32.gmra.mrb[0].mxu0 %v329
    %v403 = vpop.f32.mrb[0].mxu0
    %v404 = vadd.f32 0.0, %v403
    %v405 = vpop.f32.mrb[0].mxu0
    %406 = vmatprep.mubr.f32.mxu0 0.0
    %407 = vmatmul.mubr.f32.gmra.mrb[0].mxu0 %v331
    %v408 = vpop.f32.mrb[0].mxu0
    %v409 = vadd.f32 0.0, %v408
    %v410 = vpop.f32.mrb[0].mxu0
    %411 = vdwg.mxu0
    %v412 = vmul.f32 %v404, 0.35355338
    %v413 = vmul.f32 %v409, 0.35355338
    %v414 = vadd.f32 %v412, %v20
    %v415 = vadd.f32 %v413, %v21
    %v416 = vsel %vm217, %v414, -inf
    %417 = vmax.xlane.f32.xlu0 %v416
    %v418 = vpop.xlane.xlu0 %417
    %v419 = vsel %vm217, %v415, -inf
    %420 = vmax.xlane.f32.xlu0 %v419
    %v421 = vpop.xlane.xlu0 %420
    %v422 = vsub.f32 %v414, %v418
    %v423 = vsub.f32 %v415, %v421
    %v424 = vmul.f32 %v422, 1.442695
    %v425 = vpow.pop %v424
    %v426 = vmul.f32 %v423, 1.442695
    %v427 = vpow.pop %v426
    %v428 = vsel %vm217, %v425, 0.0
    %429 = vadd.xlane.f32.xlu0 %v428
    %v430 = vpop.xlane.xlu0 %429
    %v431 = vsel %vm217, %v427, 0.0
    %432 = vadd.xlane.f32.xlu0 %v431
    %v433 = vpop.xlane.xlu0 %432
    %v434 = vrcp.pop %v430
    %v435 = vrcp.pop %v433
    %v436 = vmul.f32 %v425, %v434
    %v437 = vmul.f32 %v427, %v435
    %440 = vrot.lane.b32.xlu0 %v105, 120
    %v441 = vpop.permute.xlu0 %440
    %442 = vrot.lane.b32.xlu0 %v109, 120
    %v443 = vpop.permute.xlu0 %442
    %v447 = vsel %vm217, %v436, 0
    %v450 = vsel %vm217, %v437, 0
    %452 = vmatprep.subr.mxu0 0.0
    %453 = vmatpush1.msra.mxu0 %v441
    %454 = vmatprep.subr.mxu0 0.0
    %455 = vmatpush1.msra.mxu0 %v443
    %456 = vmatprep.subr.mxu0 0.0
    %457 = vmatpush1.msra.mxu0 0.0
    %458 = vmatprep.subr.mxu0 0.0
    %459 = vmatpush1.msra.mxu0 0.0
    %460 = vmatprep.subr.mxu0 0.0
    %461 = vmatpush1.msra.mxu0 0.0
    %462 = vmatprep.subr.mxu0 0.0
    %463 = vmatpush1.msra.mxu0 0.0
    %464 = vmatprep.subr.mxu0 0.0
    %465 = vmatpush1.msra.mxu0 0.0
    %466 = vmatprep.subr.mxu0 0.0
    %467 = vmatpush1.msra.mxu0 0.0
    %468 = vmatprep.subr.mxu0 0.0
    %469 = vmatpush1.msra.mxu0 0.0
    %470 = vmatprep.subr.mxu0 0.0
    %471 = vmatpush1.msra.mxu0 0.0
    %472 = vmatprep.subr.mxu0 0.0
    %473 = vmatpush1.msra.mxu0 0.0
    %474 = vmatprep.subr.mxu0 0.0
    %475 = vmatpush1.msra.mxu0 0.0
    %476 = vmatprep.subr.mxu0 0.0
    %477 = vmatpush1.msra.mxu0 0.0
    %478 = vmatprep.subr.mxu0 0.0
    %479 = vmatpush1.msra.mxu0 0.0
    %480 = vmatprep.subr.mxu0 0.0
    %481 = vmatpush1.msra.mxu0 0.0
    %482 = vmatprep.subr.mxu0 0.0
    %483 = vmatpush1.msra.mxu0 0.0
    %484 = vmatprep.subr.mxu0 0.0
    %485 = vmatpush1.msra.mxu0 0.0
    %486 = vmatprep.subr.mxu0 0.0
    %487 = vmatpush1.msra.mxu0 0.0
    %488 = vmatprep.subr.mxu0 0.0
    %489 = vmatpush1.msra.mxu0 0.0
    %490 = vmatprep.subr.mxu0 0.0
    %491 = vmatpush1.msra.mxu0 0.0
    %492 = vmatprep.subr.mxu0 0.0
    %493 = vmatpush1.msra.mxu0 0.0
    %494 = vmatprep.subr.mxu0 0.0
    %495 = vmatpush1.msra.mxu0 0.0
    %496 = vmatprep.subr.mxu0 0.0
    %497 = vmatpush1.msra.mxu0 0.0
    %498 = vmatprep.subr.mxu0 0.0
    %499 = vmatpush1.msra.mxu0 0.0
    %500 = vmatprep.subr.mxu0 0.0
    %501 = vmatpush1.msra.mxu0 0.0
    %502 = vmatprep.subr.mxu0 0.0
    %503 = vmatpush1.msra.mxu0 0.0
    %504 = vmatprep.subr.mxu0 0.0
    %505 = vmatpush1.msra.mxu0 0.0
    %506 = vmatprep.subr.mxu0 0.0
    %507 = vmatpush1.msra.mxu0 0.0
    %508 = vmatprep.subr.mxu0 0.0
    %509 = vmatpush1.msra.mxu0 0.0
    %510 = vmatprep.subr.mxu0 0.0
    %511 = vmatpush1.msra.mxu0 0.0
    %512 = vmatprep.subr.mxu0 0.0
    %513 = vmatpush1.msra.mxu0 0.0
    %514 = vmatprep.subr.mxu0 0.0
    %515 = vmatpush1.msra.mxu0 0.0
    %516 = vmatprep.mubr.f32.mxu0 0.0
    %517 = vmatmul.mubr.f32.gmra.mrb[0].mxu0 %v447
    %v518 = vpop.f32.mrb[0].mxu0
    %v519 = vadd.f32 0.0, %v518
    %v520 = vpop.f32.mrb[0].mxu0
    %521 = vmatprep.mubr.f32.mxu0 0.0
    %522 = vmatmul.mubr.f32.gmra.mrb[0].mxu0 %v450
    %v523 = vpop.f32.mrb[0].mxu0
    %v524 = vadd.f32 0.0, %v523
    %v525 = vpop.f32.mrb[0].mxu0
    %526 = vdwg.mxu0
    %527 = vrot.lane.b32.xlu0 %v121, 112
    %v528 = vpop.permute.xlu0 %527
    %529 = vrot.lane.b32.xlu0 %v122, 112
    %v530 = vpop.permute.xlu0 %529
    %531 = vrot.lane.b32.xlu0 %v121, 80
    %v532 = vpop.permute.xlu0 %531
    %533 = vrot.lane.b32.xlu0 %v122, 80
    %v534 = vpop.permute.xlu0 %533
    %v535 = vsel %vm129, %v528, 0
    %v537 = vsel %vm129, %v530, 0
    %v539 = vsel %vm129, %v532, 0
    %v541 = vsel %vm129, %v534, 0
    %543 = vmatprep.subr.mxu0 0.0
    %544 = vmatpush1.xpose.msra.mxu0 %v539
    %545 = vmatprep.subr.mxu0 0.0
    %546 = vmatpush1.xpose.msra.mxu0 %v541
    %547 = vmatprep.subr.mxu0 0.0
    %548 = vmatpush1.xpose.msra.mxu0 0.0
    %549 = vmatprep.subr.mxu0 0.0
    %550 = vmatpush1.xpose.msra.mxu0 0.0
    %551 = vmatprep.subr.mxu0 0.0
    %552 = vmatpush1.xpose.msra.mxu0 0.0
    %553 = vmatprep.subr.mxu0 0.0
    %554 = vmatpush1.xpose.msra.mxu0 0.0
    %555 = vmatprep.subr.mxu0 0.0
    %556 = vmatpush1.xpose.msra.mxu0 0.0
    %557 = vmatprep.subr.mxu0 0.0
    %558 = vmatpush1.xpose.msra.mxu0 0.0
    %559 = vmatprep.subr.mxu0 0.0
    %560 = vmatpush1.xpose.msra.mxu0 0.0
    %561 = vmatprep.subr.mxu0 0.0
    %562 = vmatpush1.xpose.msra.mxu0 0.0
    %563 = vmatprep.subr.mxu0 0.0
    %564 = vmatpush1.xpose.msra.mxu0 0.0
    %565 = vmatprep.subr.mxu0 0.0
    %566 = vmatpush1.xpose.msra.mxu0 0.0
    %567 = vmatprep.subr.mxu0 0.0
    %568 = vmatpush1.xpose.msra.mxu0 0.0
    %569 = vmatprep.subr.mxu0 0.0
    %570 = vmatpush1.xpose.msra.mxu0 0.0
    %571 = vmatprep.subr.mxu0 0.0
    %572 = vmatpush1.xpose.msra.mxu0 0.0
    %573 = vmatprep.subr.mxu0 0.0
    %574 = vmatpush1.xpose.msra.mxu0 0.0
    %575 = vmatprep.subr.mxu0 0.0
    %576 = vmatpush1.xpose.msra.mxu0 0.0
    %577 = vmatprep.subr.mxu0 0.0
    %578 = vmatpush1.xpose.msra.mxu0 0.0
    %579 = vmatprep.subr.mxu0 0.0
    %580 = vmatpush1.xpose.msra.mxu0 0.0
    %581 = vmatprep.subr.mxu0 0.0
    %582 = vmatpush1.xpose.msra.mxu0 0.0
    %583 = vmatprep.subr.mxu0 0.0
    %584 = vmatpush1.xpose.msra.mxu0 0.0
    %585 = vmatprep.subr.mxu0 0.0
    %586 = vmatpush1.xpose.msra.mxu0 0.0
    %587 = vmatprep.subr.mxu0 0.0
    %588 = vmatpush1.xpose.msra.mxu0 0.0
    %589 = vmatprep.subr.mxu0 0.0
    %590 = vmatpush1.xpose.msra.mxu0 0.0
    %591 = vmatprep.subr.mxu0 0.0
    %592 = vmatpush1.xpose.msra.mxu0 0.0
    %593 = vmatprep.subr.mxu0 0.0
    %594 = vmatpush1.xpose.msra.mxu0 0.0
    %595 = vmatprep.subr.mxu0 0.0
    %596 = vmatpush1.xpose.msra.mxu0 0.0
    %597 = vmatprep.subr.mxu0 0.0
    %598 = vmatpush1.xpose.msra.mxu0 0.0
    %599 = vmatprep.subr.mxu0 0.0
    %600 = vmatpush1.xpose.msra.mxu0 0.0
    %601 = vmatprep.subr.mxu0 0.0
    %602 = vmatpush1.xpose.msra.mxu0 0.0
    %603 = vmatprep.subr.mxu0 0.0
    %604 = vmatpush1.xpose.msra.mxu0 0.0
    %605 = vmatprep.subr.mxu0 0.0
    %606 = vmatpush1.xpose.msra.mxu0 0.0
    %607 = vmatprep.mubr.f32.mxu0 0.0
    %608 = vmatmul.mubr.f32.gmra.mrb[0].mxu0 %v535
    %v609 = vpop.f32.mrb[0].mxu0
    %v610 = vadd.f32 0.0, %v609
    %v611 = vpop.f32.mrb[0].mxu0
    %612 = vmatprep.mubr.f32.mxu0 0.0
    %613 = vmatmul.mubr.f32.gmra.mrb[0].mxu0 %v537
    %v614 = vpop.f32.mrb[0].mxu0
    %v615 = vadd.f32 0.0, %v614
    %v616 = vpop.f32.mrb[0].mxu0
    %617 = vdwg.mxu0
    %v618 = vmul.f32 %v610, 0.35355338
    %v619 = vmul.f32 %v615, 0.35355338
    %v620 = vadd.f32 %v618, %v20
    %v621 = vadd.f32 %v619, %v21
    %v622 = vsel %vm217, %v620, -inf
    %623 = vmax.xlane.f32.xlu0 %v622
    %v624 = vpop.xlane.xlu0 %623
    %v625 = vsel %vm217, %v621, -inf
    %626 = vmax.xlane.f32.xlu0 %v625
    %v627 = vpop.xlane.xlu0 %626
    %v628 = vsub.f32 %v620, %v624
    %v629 = vsub.f32 %v621, %v627
    %v630 = vmul.f32 %v628, 1.442695
    %v631 = vpow.pop %v630
    %v632 = vmul.f32 %v629, 1.442695
    %v633 = vpow.pop %v632
    %v634 = vsel %vm217, %v631, 0.0
    %635 = vadd.xlane.f32.xlu0 %v634
    %v636 = vpop.xlane.xlu0 %635
    %v637 = vsel %vm217, %v633, 0.0
    %638 = vadd.xlane.f32.xlu0 %v637
    %v639 = vpop.xlane.xlu0 %638
    %v640 = vrcp.pop %v636
    %v641 = vrcp.pop %v639
    %v642 = vmul.f32 %v631, %v640
    %v643 = vmul.f32 %v633, %v641
    %644 = vrot.lane.b32.xlu0 %v105, 112
    %v645 = vpop.permute.xlu0 %644
    %646 = vrot.lane.b32.xlu0 %v109, 112
    %v647 = vpop.permute.xlu0 %646
    %v651 = vsel %vm217, %v642, 0
    %v654 = vsel %vm217, %v643, 0
    %656 = vmatprep.subr.mxu0 0.0
    %657 = vmatpush1.msra.mxu0 %v645
    %658 = vmatprep.subr.mxu0 0.0
    %659 = vmatpush1.msra.mxu0 %v647
    %660 = vmatprep.subr.mxu0 0.0
    %661 = vmatpush1.msra.mxu0 0.0
    %662 = vmatprep.subr.mxu0 0.0
    %663 = vmatpush1.msra.mxu0 0.0
    %664 = vmatprep.subr.mxu0 0.0
    %665 = vmatpush1.msra.mxu0 0.0
    %666 = vmatprep.subr.mxu0 0.0
    %667 = vmatpush1.msra.mxu0 0.0
    %668 = vmatprep.subr.mxu0 0.0
    %669 = vmatpush1.msra.mxu0 0.0
    %670 = vmatprep.subr.mxu0 0.0
    %671 = vmatpush1.msra.mxu0 0.0
    %672 = vmatprep.subr.mxu0 0.0
    %673 = vmatpush1.msra.mxu0 0.0
    %674 = vmatprep.subr.mxu0 0.0
    %675 = vmatpush1.msra.mxu0 0.0
    %676 = vmatprep.subr.mxu0 0.0
    %677 = vmatpush1.msra.mxu0 0.0
    %678 = vmatprep.subr.mxu0 0.0
    %679 = vmatpush1.msra.mxu0 0.0
    %680 = vmatprep.subr.mxu0 0.0
    %681 = vmatpush1.msra.mxu0 0.0
    %682 = vmatprep.subr.mxu0 0.0
    %683 = vmatpush1.msra.mxu0 0.0
    %684 = vmatprep.subr.mxu0 0.0
    %685 = vmatpush1.msra.mxu0 0.0
    %686 = vmatprep.subr.mxu0 0.0
    %687 = vmatpush1.msra.mxu0 0.0
    %688 = vmatprep.subr.mxu0 0.0
    %689 = vmatpush1.msra.mxu0 0.0
    %690 = vmatprep.subr.mxu0 0.0
    %691 = vmatpush1.msra.mxu0 0.0
    %692 = vmatprep.subr.mxu0 0.0
    %693 = vmatpush1.msra.mxu0 0.0
    %694 = vmatprep.subr.mxu0 0.0
    %695 = vmatpush1.msra.mxu0 0.0
    %696 = vmatprep.subr.mxu0 0.0
    %697 = vmatpush1.msra.mxu0 0.0
    %698 = vmatprep.subr.mxu0 0.0
    %699 = vmatpush1.msra.mxu0 0.0
    %700 = vmatprep.subr.mxu0 0.0
    %701 = vmatpush1.msra.mxu0 0.0
    %702 = vmatprep.subr.mxu0 0.0
    %703 = vmatpush1.msra.mxu0 0.0
    %704 = vmatprep.subr.mxu0 0.0
    %705 = vmatpush1.msra.mxu0 0.0
    %706 = vmatprep.subr.mxu0 0.0
    %707 = vmatpush1.msra.mxu0 0.0
    %708 = vmatprep.subr.mxu0 0.0
    %709 = vmatpush1.msra.mxu0 0.0
    %710 = vmatprep.subr.mxu0 0.0
    %711 = vmatpush1.msra.mxu0 0.0
    %712 = vmatprep.subr.mxu0 0.0
    %713 = vmatpush1.msra.mxu0 0.0
    %714 = vmatprep.subr.mxu0 0.0
    %715 = vmatpush1.msra.mxu0 0.0
    %716 = vmatprep.subr.mxu0 0.0
    %717 = vmatpush1.msra.mxu0 0.0
    %718 = vmatprep.subr.mxu0 0.0
    %719 = vmatpush1.msra.mxu0 0.0
    %720 = vmatprep.mubr.f32.mxu0 0.0
    %721 = vmatmul.mubr.f32.gmra.mrb[0].mxu0 %v651
    %v722 = vpop.f32.mrb[0].mxu0
    %v723 = vadd.f32 0.0, %v722
    %v724 = vpop.f32.mrb[0].mxu0
    %725 = vmatprep.mubr.f32.mxu0 0.0
    %726 = vmatmul.mubr.f32.gmra.mrb[0].mxu0 %v654
    %v727 = vpop.f32.mrb[0].mxu0
    %v728 = vadd.f32 0.0, %v727
    %v729 = vpop.f32.mrb[0].mxu0
    %730 = vdwg.mxu0
    %731 = vrot.lane.b32.xlu0 %v121, 104
    %v732 = vpop.permute.xlu0 %731
    %733 = vrot.lane.b32.xlu0 %v122, 104
    %v734 = vpop.permute.xlu0 %733
    %735 = vrot.lane.b32.xlu0 %v121, 72
    %v736 = vpop.permute.xlu0 %735
    %737 = vrot.lane.b32.xlu0 %v122, 72
    %v738 = vpop.permute.xlu0 %737
    %v739 = vsel %vm129, %v732, 0
    %v741 = vsel %vm129, %v734, 0
    %v743 = vsel %vm129, %v736, 0
    %v745 = vsel %vm129, %v738, 0
    %747 = vmatprep.subr.mxu0 0.0
    %748 = vmatpush1.xpose.msra.mxu0 %v743
    %749 = vmatprep.subr.mxu0 0.0
    %750 = vmatpush1.xpose.msra.mxu0 %v745
    %751 = vmatprep.subr.mxu0 0.0
    %752 = vmatpush1.xpose.msra.mxu0 0.0
    %753 = vmatprep.subr.mxu0 0.0
    %754 = vmatpush1.xpose.msra.mxu0 0.0
    %755 = vmatprep.subr.mxu0 0.0
    %756 = vmatpush1.xpose.msra.mxu0 0.0
    %757 = vmatprep.subr.mxu0 0.0
    %758 = vmatpush1.xpose.msra.mxu0 0.0
    %759 = vmatprep.subr.mxu0 0.0
    %760 = vmatpush1.xpose.msra.mxu0 0.0
    %761 = vmatprep.subr.mxu0 0.0
    %762 = vmatpush1.xpose.msra.mxu0 0.0
    %763 = vmatprep.subr.mxu0 0.0
    %764 = vmatpush1.xpose.msra.mxu0 0.0
    %765 = vmatprep.subr.mxu0 0.0
    %766 = vmatpush1.xpose.msra.mxu0 0.0
    %767 = vmatprep.subr.mxu0 0.0
    %768 = vmatpush1.xpose.msra.mxu0 0.0
    %769 = vmatprep.subr.mxu0 0.0
    %770 = vmatpush1.xpose.msra.mxu0 0.0
    %771 = vmatprep.subr.mxu0 0.0
    %772 = vmatpush1.xpose.msra.mxu0 0.0
    %773 = vmatprep.subr.mxu0 0.0
    %774 = vmatpush1.xpose.msra.mxu0 0.0
    %775 = vmatprep.subr.mxu0 0.0
    %776 = vmatpush1.xpose.msra.mxu0 0.0
    %777 = vmatprep.subr.mxu0 0.0
    %778 = vmatpush1.xpose.msra.mxu0 0.0
    %779 = vmatprep.subr.mxu0 0.0
    %780 = vmatpush1.xpose.msra.mxu0 0.0
    %781 = vmatprep.subr.mxu0 0.0
    %782 = vmatpush1.xpose.msra.mxu0 0.0
    %783 = vmatprep.subr.mxu0 0.0
    %784 = vmatpush1.xpose.msra.mxu0 0.0
    %785 = vmatprep.subr.mxu0 0.0
    %786 = vmatpush1.xpose.msra.mxu0 0.0
    %787 = vmatprep.subr.mxu0 0.0
    %788 = vmatpush1.xpose.msra.mxu0 0.0
    %789 = vmatprep.subr.mxu0 0.0
    %790 = vmatpush1.xpose.msra.mxu0 0.0
    %791 = vmatprep.subr.mxu0 0.0
    %792 = vmatpush1.xpose.msra.mxu0 0.0
    %793 = vmatprep.subr.mxu0 0.0
    %794 = vmatpush1.xpose.msra.mxu0 0.0
    %795 = vmatprep.subr.mxu0 0.0
    %796 = vmatpush1.xpose.msra.mxu0 0.0
    %797 = vmatprep.subr.mxu0 0.0
    %798 = vmatpush1.xpose.msra.mxu0 0.0
    %799 = vmatprep.subr.mxu0 0.0
    %800 = vmatpush1.xpose.msra.mxu0 0.0
    %801 = vmatprep.subr.mxu0 0.0
    %802 = vmatpush1.xpose.msra.mxu0 0.0
    %803 = vmatprep.subr.mxu0 0.0
    %804 = vmatpush1.xpose.msra.mxu0 0.0
    %805 = vmatprep.subr.mxu0 0.0
    %806 = vmatpush1.xpose.msra.mxu0 0.0
    %807 = vmatprep.subr.mxu0 0.0
    %808 = vmatpush1.xpose.msra.mxu0 0.0
    %809 = vmatprep.subr.mxu0 0.0
    %810 = vmatpush1.xpose.msra.mxu0 0.0
    %811 = vmatprep.mubr.f32.mxu0 0.0
    %812 = vmatmul.mubr.f32.gmra.mrb[0].mxu0 %v739
    %v813 = vpop.f32.mrb[0].mxu0
    %v814 = vadd.f32 0.0, %v813
    %v815 = vpop.f32.mrb[0].mxu0
    %816 = vmatprep.mubr.f32.mxu0 0.0
    %817 = vmatmul.mubr.f32.gmra.mrb[0].mxu0 %v741
    %v818 = vpop.f32.mrb[0].mxu0
    %v819 = vadd.f32 0.0, %v818
    %v820 = vpop.f32.mrb[0].mxu0
    %821 = vdwg.mxu0
    %v822 = vmul.f32 %v814, 0.35355338
    %v823 = vmul.f32 %v819, 0.35355338
    %v824 = vadd.f32 %v822, %v20
    %v825 = vadd.f32 %v823, %v21
    %v826 = vsel %vm217, %v824, -inf
    %827 = vmax.xlane.f32.xlu0 %v826
    %v828 = vpop.xlane.xlu0 %827
    %v829 = vsel %vm217, %v825, -inf
    %830 = vmax.xlane.f32.xlu0 %v829
    %v831 = vpop.xlane.xlu0 %830
    %v832 = vsub.f32 %v824, %v828
    %v833 = vsub.f32 %v825, %v831
    %v834 = vmul.f32 %v832, 1.442695
    %v835 = vpow.pop %v834
    %v836 = vmul.f32 %v833, 1.442695
    %v837 = vpow.pop %v836
    %v838 = vsel %vm217, %v835, 0.0
    %839 = vadd.xlane.f32.xlu0 %v838
    %v840 = vpop.xlane.xlu0 %839
    %v841 = vsel %vm217, %v837, 0.0
    %842 = vadd.xlane.f32.xlu0 %v841
    %v843 = vpop.xlane.xlu0 %842
    %v844 = vrcp.pop %v840
    %v845 = vrcp.pop %v843
    %v846 = vmul.f32 %v835, %v844
    %v847 = vmul.f32 %v837, %v845
    %848 = vrot.lane.b32.xlu0 %v105, 104
    %v849 = vpop.permute.xlu0 %848
    %850 = vrot.lane.b32.xlu0 %v109, 104
    %v851 = vpop.permute.xlu0 %850
    %v855 = vsel %vm217, %v846, 0
    %v858 = vsel %vm217, %v847, 0
    %860 = vmatprep.subr.mxu0 0.0
    %861 = vmatpush1.msra.mxu0 %v849
    %862 = vmatprep.subr.mxu0 0.0
    %863 = vmatpush1.msra.mxu0 %v851
    %864 = vmatprep.subr.mxu0 0.0
    %865 = vmatpush1.msra.mxu0 0.0
    %866 = vmatprep.subr.mxu0 0.0
    %867 = vmatpush1.msra.mxu0 0.0
    %868 = vmatprep.subr.mxu0 0.0
    %869 = vmatpush1.msra.mxu0 0.0
    %870 = vmatprep.subr.mxu0 0.0
    %871 = vmatpush1.msra.mxu0 0.0
    %872 = vmatprep.subr.mxu0 0.0
    %873 = vmatpush1.msra.mxu0 0.0
    %874 = vmatprep.subr.mxu0 0.0
    %875 = vmatpush1.msra.mxu0 0.0
    %876 = vmatprep.subr.mxu0 0.0
    %877 = vmatpush1.msra.mxu0 0.0
    %878 = vmatprep.subr.mxu0 0.0
    %879 = vmatpush1.msra.mxu0 0.0
    %880 = vmatprep.subr.mxu0 0.0
    %881 = vmatpush1.msra.mxu0 0.0
    %882 = vmatprep.subr.mxu0 0.0
    %883 = vmatpush1.msra.mxu0 0.0
    %884 = vmatprep.subr.mxu0 0.0
    %885 = vmatpush1.msra.mxu0 0.0
    %886 = vmatprep.subr.mxu0 0.0
    %887 = vmatpush1.msra.mxu0 0.0
    %888 = vmatprep.subr.mxu0 0.0
    %889 = vmatpush1.msra.mxu0 0.0
    %890 = vmatprep.subr.mxu0 0.0
    %891 = vmatpush1.msra.mxu0 0.0
    %892 = vmatprep.subr.mxu0 0.0
    %893 = vmatpush1.msra.mxu0 0.0
    %894 = vmatprep.subr.mxu0 0.0
    %895 = vmatpush1.msra.mxu0 0.0
    %896 = vmatprep.subr.mxu0 0.0
    %897 = vmatpush1.msra.mxu0 0.0
    %898 = vmatprep.subr.mxu0 0.0
    %899 = vmatpush1.msra.mxu0 0.0
    %900 = vmatprep.subr.mxu0 0.0
    %901 = vmatpush1.msra.mxu0 0.0
    %902 = vmatprep.subr.mxu0 0.0
    %903 = vmatpush1.msra.mxu0 0.0
    %904 = vmatprep.subr.mxu0 0.0
    %905 = vmatpush1.msra.mxu0 0.0
    %906 = vmatprep.subr.mxu0 0.0
    %907 = vmatpush1.msra.mxu0 0.0
    %908 = vmatprep.subr.mxu0 0.0
    %909 = vmatpush1.msra.mxu0 0.0
    %910 = vmatprep.subr.mxu0 0.0
    %911 = vmatpush1.msra.mxu0 0.0
    %912 = vmatprep.subr.mxu0 0.0
    %913 = vmatpush1.msra.mxu0 0.0
    %914 = vmatprep.subr.mxu0 0.0
    %915 = vmatpush1.msra.mxu0 0.0
    %916 = vmatprep.subr.mxu0 0.0
    %917 = vmatpush1.msra.mxu0 0.0
    %918 = vmatprep.subr.mxu0 0.0
    %919 = vmatpush1.msra.mxu0 0.0
    %920 = vmatprep.subr.mxu0 0.0
    %921 = vmatpush1.msra.mxu0 0.0
    %922 = vmatprep.subr.mxu0 0.0
    %923 = vmatpush1.msra.mxu0 0.0
    %924 = vmatprep.mubr.f32.mxu0 0.0
    %925 = vmatmul.mubr.f32.gmra.mrb[0].mxu0 %v855
    %v926 = vpop.f32.mrb[0].mxu0
    %v927 = vadd.f32 0.0, %v926
    %v928 = vpop.f32.mrb[0].mxu0
    %929 = vmatprep.mubr.f32.mxu0 0.0
    %930 = vmatmul.mubr.f32.gmra.mrb[0].mxu0 %v858
    %v931 = vpop.f32.mrb[0].mxu0
    %v932 = vadd.f32 0.0, %v931
    %v933 = vpop.f32.mrb[0].mxu0
    %934 = vdwg.mxu0
    %937 = vrot.lane.b32.xlu0 %v519, 8
    %v938 = vpop.permute.xlu0 %937
    %939 = vrot.lane.b32.xlu0 %v524, 8
    %v940 = vpop.permute.xlu0 %939
    %945 = vrot.lane.b32.xlu0 %v723, 16
    %v946 = vpop.permute.xlu0 %945
    %947 = vrot.lane.b32.xlu0 %v728, 16
    %v948 = vpop.permute.xlu0 %947
    %953 = vrot.lane.b32.xlu0 %v927, 24
    %v954 = vpop.permute.xlu0 %953
    %955 = vrot.lane.b32.xlu0 %v932, 24
    %v956 = vpop.permute.xlu0 %955
    %v959 = vsel %vm129, %v313, %v938
    %v960 = vsel %vm129, %v318, %v940
    %v961 = vsel %vm217, %v959, %v946
    %v962 = vsel %vm217, %v960, %v948
    %vm963 = vcmask 195584
    %v964 = vsel %vm963, %v961, %v954
    %v965 = vsel %vm963, %v962, %v956
    %v966 = vpack.c.bf16 %v965, %v964
    %v967 = vld [vmem:[%s1 + $0x8] sm:$0xf]
    %v968 = vld [vmem:[%s1 + $0x40] sm:$0xf]
    %v969 = vld [vmem:[%s1 + $0x78] sm:$0xf]
    %v970 = vld [vmem:[%s1 + $0xb0] sm:$0xf]
    %v975 = vunpack.c.l.b16 %v967
    %v976 = vunpack.c.l.b16 %v968
    %v977 = vunpack.c.l.b16 %v969
    %v978 = vunpack.c.l.b16 %v970
    %v979 = vpack.c.b16 %v976, %v975
    %v980 = vpack.c.b16 %v978, %v977
    %v984 = vsel %vm24, %v966, 0
    %986 = vmatprep.subr.bf16.mxu0 0
    %987 = vmatpush1.bf16.msra.mxu0 %v979
    %988 = vmatprep.subr.bf16.mxu0 0
    %989 = vmatpush1.bf16.msra.mxu0 %v980
    %990 = vmatprep.subr.bf16.mxu0 0
    %991 = vmatpush1.bf16.msra.mxu0 0
    %992 = vmatprep.subr.bf16.mxu0 0
    %993 = vmatpush1.bf16.msra.mxu0 0
    %994 = vmatprep.subr.bf16.mxu0 0
    %995 = vmatpush1.bf16.msra.mxu0 0
    %996 = vmatprep.subr.bf16.mxu0 0
    %997 = vmatpush1.bf16.msra.mxu0 0
    %998 = vmatprep.subr.bf16.mxu0 0
    %999 = vmatpush1.bf16.msra.mxu0 0
    %1000 = vmatprep.subr.bf16.mxu0 0
    %1001 = vmatpush1.bf16.msra.mxu0 0
    %1002 = vmatprep.subr.bf16.mxu0 0
    %1003 = vmatpush1.bf16.msra.mxu0 0
    %1004 = vmatprep.subr.bf16.mxu0 0
    %1005 = vmatpush1.bf16.msra.mxu0 0
    %1006 = vmatprep.subr.bf16.mxu0 0
    %1007 = vmatpush1.bf16.msra.mxu0 0
    %1008 = vmatprep.subr.bf16.mxu0 0
    %1009 = vmatpush1.bf16.msra.mxu0 0
    %1010 = vmatprep.subr.bf16.mxu0 0
    %1011 = vmatpush1.bf16.msra.mxu0 0
    %1012 = vmatprep.subr.bf16.mxu0 0
    %1013 = vmatpush1.bf16.msra.mxu0 0
    %1014 = vmatprep.subr.bf16.mxu0 0
    %1015 = vmatpush1.bf16.msra.mxu0 0
    %1016 = vmatprep.subr.bf16.mxu0 0
    %1017 = vmatpush1.bf16.msra.mxu0 0
    %1018 = vmatprep.mubr.bf16.mxu0 0
    %1019 = vmatmul.mubr.bf16.gmra.mrb[0].mxu0 %v984
    %v1020 = vpop.f32.mrb[0].mxu0
    %v1021 = vadd.f32 0.0, %v1020
    %v1022 = vpop.f32.mrb[0].mxu0
    %v1023 = vpop.f32.mrb[0].mxu0
    %v1024 = vadd.f32 0.0, %v1023
    %v1025 = vpop.f32.mrb[0].mxu0
    %1026 = vdwg.mxu0
    %v1027 = vadd.f32 %v16, %v1021
    %v1028 = vadd.f32 %v17, %v1024
    %1029 = vrot.lane.b32.xlu0 %v105, 96
    %v1030 = vpop.permute.xlu0 %1029
    %1031 = vrot.lane.b32.xlu0 %v109, 96
    %v1032 = vpop.permute.xlu0 %1031
    %v1035 = vadd.f32 %v1027, %v1030
    %v1036 = vadd.f32 %v1028, %v1032
    %v1037 = vmul.f32 %v1035, %v1035
    %v1038 = vmul.f32 %v1036, %v1036
    %v1039 = vsel %vm24, %v1037, 0.0
    %1040 = vadd.xlane.f32.xlu0 %v1039
    %v1041 = vpop.xlane.xlu0 %1040
    %v1042 = vsel %vm24, %v1038, 0.0
    %1043 = vadd.xlane.f32.xlu0 %v1042
    %v1044 = vpop.xlane.xlu0 %1043
    %v1045 = vmul.f32 %v1041, %v31
    %v1046 = vmul.f32 %v1044, %v31
    %v1047 = vadd.f32 %v1045, 1e-05
    %v1048 = vadd.f32 %v1046, 1e-05
    %v1049 = vrsqrt.pop %v1047
    %v1050 = vrsqrt.pop %v1048
    %v1051 = vmul.f32 %v1035, %v1049
    %v1052 = vmul.f32 %v1036, %v1050
    %v1053 = vpack.c.bf16 %v1052, %v1051
    %v1054 = vld [vmem:[%s1 + $0xc] sm:$0xff]
    %v1055 = vld [vmem:[%s1 + $0x14] sm:$0xff]
    %v1056 = vld [vmem:[%s1 + $0x1c] sm:$0xff]
    %v1057 = vld [vmem:[%s1 + $0x24] sm:$0xff]
    %v1058 = vld [vmem:[%s1 + $0x2c] sm:$0xff]
    %v1059 = vld [vmem:[%s1 + $0x34] sm:$0xf]
    %v1060 = vld [vmem:[%s1 + $0x44] sm:$0xff]
    %v1061 = vld [vmem:[%s1 + $0x4c] sm:$0xff]
    %v1062 = vld [vmem:[%s1 + $0x54] sm:$0xff]
    %v1063 = vld [vmem:[%s1 + $0x5c] sm:$0xff]
    %v1064 = vld [vmem:[%s1 + $0x64] sm:$0xff]
    %v1065 = vld [vmem:[%s1 + $0x6c] sm:$0xf]
    %v1066 = vld [vmem:[%s1 + $0x7c] sm:$0xff]
    %v1067 = vld [vmem:[%s1 + $0x84] sm:$0xff]
    %v1068 = vld [vmem:[%s1 + $0x8c] sm:$0xff]
    %v1069 = vld [vmem:[%s1 + $0x94] sm:$0xff]
    %v1070 = vld [vmem:[%s1 + $0x9c] sm:$0xff]
    %v1071 = vld [vmem:[%s1 + $0xa4] sm:$0xf]
    %v1072 = vld [vmem:[%s1 + $0xb4] sm:$0xff]
    %v1073 = vld [vmem:[%s1 + $0xbc] sm:$0xff]
    %v1074 = vld [vmem:[%s1 + $0xc4] sm:$0xff]
    %v1075 = vld [vmem:[%s1 + $0xcc] sm:$0xff]
    %v1076 = vld [vmem:[%s1 + $0xd4] sm:$0xff]
    %v1077 = vld [vmem:[%s1 + $0xdc] sm:$0xf]
    %v1102 = vunpack.c.l.b16 %v1054
    %v1103 = vunpack.c.h.b16 %v1054
    %v1104 = vunpack.c.l.b16 %v1055
    %v1105 = vunpack.c.h.b16 %v1055
    %v1106 = vunpack.c.l.b16 %v1056
    %v1107 = vunpack.c.h.b16 %v1056
    %v1108 = vunpack.c.l.b16 %v1057
    %v1109 = vunpack.c.h.b16 %v1057
    %v1110 = vunpack.c.l.b16 %v1058
    %v1111 = vunpack.c.h.b16 %v1058
    %v1112 = vunpack.c.l.b16 %v1059
    %v1113 = vunpack.c.l.b16 %v1060
    %v1114 = vunpack.c.h.b16 %v1060
    %v1115 = vunpack.c.l.b16 %v1061
    %v1116 = vunpack.c.h.b16 %v1061
    %v1117 = vunpack.c.l.b16 %v1062
    %v1118 = vunpack.c.h.b16 %v1062
    %v1119 = vunpack.c.l.b16 %v1063
    %v1120 = vunpack.c.h.b16 %v1063
    %v1121 = vunpack.c.l.b16 %v1064
    %v1122 = vunpack.c.h.b16 %v1064
    %v1123 = vunpack.c.l.b16 %v1065
    %v1124 = vunpack.c.l.b16 %v1066
    %v1125 = vunpack.c.h.b16 %v1066
    %v1126 = vunpack.c.l.b16 %v1067
    %v1127 = vunpack.c.h.b16 %v1067
    %v1128 = vunpack.c.l.b16 %v1068
    %v1129 = vunpack.c.h.b16 %v1068
    %v1130 = vunpack.c.l.b16 %v1069
    %v1131 = vunpack.c.h.b16 %v1069
    %v1132 = vunpack.c.l.b16 %v1070
    %v1133 = vunpack.c.h.b16 %v1070
    %v1134 = vunpack.c.l.b16 %v1071
    %v1135 = vunpack.c.l.b16 %v1072
    %v1136 = vunpack.c.h.b16 %v1072
    %v1137 = vunpack.c.l.b16 %v1073
    %v1138 = vunpack.c.h.b16 %v1073
    %v1139 = vunpack.c.l.b16 %v1074
    %v1140 = vunpack.c.h.b16 %v1074
    %v1141 = vunpack.c.l.b16 %v1075
    %v1142 = vunpack.c.h.b16 %v1075
    %v1143 = vunpack.c.l.b16 %v1076
    %v1144 = vunpack.c.h.b16 %v1076
    %v1145 = vunpack.c.l.b16 %v1077
    %v1146 = vpack.c.b16 %v1113, %v1102
    %v1147 = vpack.c.b16 %v1114, %v1103
    %v1148 = vpack.c.b16 %v1115, %v1104
    %v1149 = vpack.c.b16 %v1116, %v1105
    %v1150 = vpack.c.b16 %v1117, %v1106
    %v1151 = vpack.c.b16 %v1118, %v1107
    %v1152 = vpack.c.b16 %v1119, %v1108
    %v1153 = vpack.c.b16 %v1120, %v1109
    %v1154 = vpack.c.b16 %v1121, %v1110
    %v1155 = vpack.c.b16 %v1122, %v1111
    %v1156 = vpack.c.b16 %v1123, %v1112
    %v1157 = vpack.c.b16 %v1135, %v1124
    %v1158 = vpack.c.b16 %v1136, %v1125
    %v1159 = vpack.c.b16 %v1137, %v1126
    %v1160 = vpack.c.b16 %v1138, %v1127
    %v1161 = vpack.c.b16 %v1139, %v1128
    %v1162 = vpack.c.b16 %v1140, %v1129
    %v1163 = vpack.c.b16 %v1141, %v1130
    %v1164 = vpack.c.b16 %v1142, %v1131
    %v1165 = vpack.c.b16 %v1143, %v1132
    %v1166 = vpack.c.b16 %v1144, %v1133
    %v1167 = vpack.c.b16 %v1145, %v1134
    %v1191 = vsel %vm24, %v1053, 0
    %1193 = vmatprep.subr.bf16.mxu0 %v1147
    %1194 = vmatpush1.bf16.msra.mxu0 %v1146
    %1195 = vmatprep.subr.bf16.mxu0 %v1158
    %1196 = vmatpush1.bf16.msra.mxu0 %v1157
    %1197 = vmatprep.subr.bf16.mxu0 0
    %1198 = vmatpush1.bf16.msra.mxu0 0
    %1199 = vmatprep.subr.bf16.mxu0 0
    %1200 = vmatpush1.bf16.msra.mxu0 0
    %1201 = vmatprep.subr.bf16.mxu0 0
    %1202 = vmatpush1.bf16.msra.mxu0 0
    %1203 = vmatprep.subr.bf16.mxu0 0
    %1204 = vmatpush1.bf16.msra.mxu0 0
    %1205 = vmatprep.subr.bf16.mxu0 0
    %1206 = vmatpush1.bf16.msra.mxu0 0
    %1207 = vmatprep.subr.bf16.mxu0 0
    %1208 = vmatpush1.bf16.msra.mxu0 0
    %1209 = vmatprep.subr.bf16.mxu0 0
    %1210 = vmatpush1.bf16.msra.mxu0 0
    %1211 = vmatprep.subr.bf16.mxu0 0
    %1212 = vmatpush1.bf16.msra.mxu0 0
    %1213 = vmatprep.subr.bf16.mxu0 0
    %1214 = vmatpush1.bf16.msra.mxu0 0
    %1215 = vmatprep.subr.bf16.mxu0 0
    %1216 = vmatpush1.bf16.msra.mxu0 0
    %1217 = vmatprep.subr.bf16.mxu0 0
    %1218 = vmatpush1.bf16.msra.mxu0 0
    %1219 = vmatprep.subr.bf16.mxu0 0
    %1220 = vmatpush1.bf16.msra.mxu0 0
    %1221 = vmatprep.subr.bf16.mxu0 0
    %1222 = vmatpush1.bf16.msra.mxu0 0
    %1223 = vmatprep.subr.bf16.mxu0 0
    %1224 = vmatpush1.bf16.msra.mxu0 0
    %1225 = vmatprep.mubr.bf16.mxu0 0
    %1226 = vmatmul.mubr.bf16.gmra.mrb[0].mxu0 %v1191
    %v1227 = vpop.f32.mrb[0].mxu0
    %v1228 = vadd.f32 0.0, %v1227
    %v1229 = vpop.f32.mrb[0].mxu0
    %v1230 = vadd.f32 0.0, %v1229
    %v1231 = vpop.f32.mrb[0].mxu0
    %v1232 = vadd.f32 0.0, %v1231
    %v1233 = vpop.f32.mrb[0].mxu0
    %v1234 = vadd.f32 0.0, %v1233
    %1235 = vdwg.mxu0
    %1236 = vmatprep.subr.bf16.mxu0 %v1149
    %1237 = vmatpush1.bf16.msra.mxu0 %v1148
    %1238 = vmatprep.subr.bf16.mxu0 %v1160
    %1239 = vmatpush1.bf16.msra.mxu0 %v1159
    %1240 = vmatprep.subr.bf16.mxu0 0
    %1241 = vmatpush1.bf16.msra.mxu0 0
    %1242 = vmatprep.subr.bf16.mxu0 0
    %1243 = vmatpush1.bf16.msra.mxu0 0
    %1244 = vmatprep.subr.bf16.mxu0 0
    %1245 = vmatpush1.bf16.msra.mxu0 0
    %1246 = vmatprep.subr.bf16.mxu0 0
    %1247 = vmatpush1.bf16.msra.mxu0 0
    %1248 = vmatprep.subr.bf16.mxu0 0
    %1249 = vmatpush1.bf16.msra.mxu0 0
    %1250 = vmatprep.subr.bf16.mxu0 0
    %1251 = vmatpush1.bf16.msra.mxu0 0
    %1252 = vmatprep.subr.bf16.mxu0 0
    %1253 = vmatpush1.bf16.msra.mxu0 0
    %1254 = vmatprep.subr.bf16.mxu0 0
    %1255 = vmatpush1.bf16.msra.mxu0 0
    %1256 = vmatprep.subr.bf16.mxu0 0
    %1257 = vmatpush1.bf16.msra.mxu0 0
    %1258 = vmatprep.subr.bf16.mxu0 0
    %1259 = vmatpush1.bf16.msra.mxu0 0
    %1260 = vmatprep.subr.bf16.mxu0 0
    %1261 = vmatpush1.bf16.msra.mxu0 0
    %1262 = vmatprep.subr.bf16.mxu0 0
    %1263 = vmatpush1.bf16.msra.mxu0 0
    %1264 = vmatprep.subr.bf16.mxu0 0
    %1265 = vmatpush1.bf16.msra.mxu0 0
    %1266 = vmatprep.subr.bf16.mxu0 0
    %1267 = vmatpush1.bf16.msra.mxu0 0
    %1268 = vmatprep.mubr.bf16.mxu0 0
    %1269 = vmatmul.mubr.bf16.gmra.mrb[0].mxu0 %v1191
    %v1270 = vpop.f32.mrb[0].mxu0
    %v1271 = vadd.f32 0.0, %v1270
    %v1272 = vpop.f32.mrb[0].mxu0
    %v1273 = vadd.f32 0.0, %v1272
    %v1274 = vpop.f32.mrb[0].mxu0
    %v1275 = vadd.f32 0.0, %v1274
    %v1276 = vpop.f32.mrb[0].mxu0
    %v1277 = vadd.f32 0.0, %v1276
    %1278 = vdwg.mxu0
    %1279 = vmatprep.subr.bf16.mxu0 %v1151
    %1280 = vmatpush1.bf16.msra.mxu0 %v1150
    %1281 = vmatprep.subr.bf16.mxu0 %v1162
    %1282 = vmatpush1.bf16.msra.mxu0 %v1161
    %1283 = vmatprep.subr.bf16.mxu0 0
    %1284 = vmatpush1.bf16.msra.mxu0 0
    %1285 = vmatprep.subr.bf16.mxu0 0
    %1286 = vmatpush1.bf16.msra.mxu0 0
    %1287 = vmatprep.subr.bf16.mxu0 0
    %1288 = vmatpush1.bf16.msra.mxu0 0
    %1289 = vmatprep.subr.bf16.mxu0 0
    %1290 = vmatpush1.bf16.msra.mxu0 0
    %1291 = vmatprep.subr.bf16.mxu0 0
    %1292 = vmatpush1.bf16.msra.mxu0 0
    %1293 = vmatprep.subr.bf16.mxu0 0
    %1294 = vmatpush1.bf16.msra.mxu0 0
    %1295 = vmatprep.subr.bf16.mxu0 0
    %1296 = vmatpush1.bf16.msra.mxu0 0
    %1297 = vmatprep.subr.bf16.mxu0 0
    %1298 = vmatpush1.bf16.msra.mxu0 0
    %1299 = vmatprep.subr.bf16.mxu0 0
    %1300 = vmatpush1.bf16.msra.mxu0 0
    %1301 = vmatprep.subr.bf16.mxu0 0
    %1302 = vmatpush1.bf16.msra.mxu0 0
    %1303 = vmatprep.subr.bf16.mxu0 0
    %1304 = vmatpush1.bf16.msra.mxu0 0
    %1305 = vmatprep.subr.bf16.mxu0 0
    %1306 = vmatpush1.bf16.msra.mxu0 0
    %1307 = vmatprep.subr.bf16.mxu0 0
    %1308 = vmatpush1.bf16.msra.mxu0 0
    %1309 = vmatprep.subr.bf16.mxu0 0
    %1310 = vmatpush1.bf16.msra.mxu0 0
    %1311 = vmatprep.mubr.bf16.mxu0 0
    %1312 = vmatmul.mubr.bf16.gmra.mrb[0].mxu0 %v1191
    %v1313 = vpop.f32.mrb[0].mxu0
    %v1314 = vadd.f32 0.0, %v1313
    %v1315 = vpop.f32.mrb[0].mxu0
    %v1316 = vadd.f32 0.0, %v1315
    %v1317 = vpop.f32.mrb[0].mxu0
    %v1318 = vadd.f32 0.0, %v1317
    %v1319 = vpop.f32.mrb[0].mxu0
    %v1320 = vadd.f32 0.0, %v1319
    %1321 = vdwg.mxu0
    %1322 = vmatprep.subr.bf16.mxu0 %v1153
    %1323 = vmatpush1.bf16.msra.mxu0 %v1152
    %1324 = vmatprep.subr.bf16.mxu0 %v1164
    %1325 = vmatpush1.bf16.msra.mxu0 %v1163
    %1326 = vmatprep.subr.bf16.mxu0 0
    %1327 = vmatpush1.bf16.msra.mxu0 0
    %1328 = vmatprep.subr.bf16.mxu0 0
    %1329 = vmatpush1.bf16.msra.mxu0 0
    %1330 = vmatprep.subr.bf16.mxu0 0
    %1331 = vmatpush1.bf16.msra.mxu0 0
    %1332 = vmatprep.subr.bf16.mxu0 0
    %1333 = vmatpush1.bf16.msra.mxu0 0
    %1334 = vmatprep.subr.bf16.mxu0 0
    %1335 = vmatpush1.bf16.msra.mxu0 0
    %1336 = vmatprep.subr.bf16.mxu0 0
    %1337 = vmatpush1.bf16.msra.mxu0 0
    %1338 = vmatprep.subr.bf16.mxu0 0
    %1339 = vmatpush1.bf16.msra.mxu0 0
    %1340 = vmatprep.subr.bf16.mxu0 0
    %1341 = vmatpush1.bf16.msra.mxu0 0
    %1342 = vmatprep.subr.bf16.mxu0 0
    %1343 = vmatpush1.bf16.msra.mxu0 0
    %1344 = vmatprep.subr.bf16.mxu0 0
    %1345 = vmatpush1.bf16.msra.mxu0 0
    %1346 = vmatprep.subr.bf16.mxu0 0
    %1347 = vmatpush1.bf16.msra.mxu0 0
    %1348 = vmatprep.subr.bf16.mxu0 0
    %1349 = vmatpush1.bf16.msra.mxu0 0
    %1350 = vmatprep.subr.bf16.mxu0 0
    %1351 = vmatpush1.bf16.msra.mxu0 0
    %1352 = vmatprep.subr.bf16.mxu0 0
    %1353 = vmatpush1.bf16.msra.mxu0 0
    %1354 = vmatprep.mubr.bf16.mxu0 0
    %1355 = vmatmul.mubr.bf16.gmra.mrb[0].mxu0 %v1191
    %v1356 = vpop.f32.mrb[0].mxu0
    %v1357 = vadd.f32 0.0, %v1356
    %v1358 = vpop.f32.mrb[0].mxu0
    %v1359 = vadd.f32 0.0, %v1358
    %v1360 = vpop.f32.mrb[0].mxu0
    %v1361 = vadd.f32 0.0, %v1360
    %v1362 = vpop.f32.mrb[0].mxu0
    %v1363 = vadd.f32 0.0, %v1362
    %1364 = vdwg.mxu0
    %1365 = vmatprep.subr.bf16.mxu0 %v1155
    %1366 = vmatpush1.bf16.msra.mxu0 %v1154
    %1367 = vmatprep.subr.bf16.mxu0 %v1166
    %1368 = vmatpush1.bf16.msra.mxu0 %v1165
    %1369 = vmatprep.subr.bf16.mxu0 0
    %1370 = vmatpush1.bf16.msra.mxu0 0
    %1371 = vmatprep.subr.bf16.mxu0 0
    %1372 = vmatpush1.bf16.msra.mxu0 0
    %1373 = vmatprep.subr.bf16.mxu0 0
    %1374 = vmatpush1.bf16.msra.mxu0 0
    %1375 = vmatprep.subr.bf16.mxu0 0
    %1376 = vmatpush1.bf16.msra.mxu0 0
    %1377 = vmatprep.subr.bf16.mxu0 0
    %1378 = vmatpush1.bf16.msra.mxu0 0
    %1379 = vmatprep.subr.bf16.mxu0 0
    %1380 = vmatpush1.bf16.msra.mxu0 0
    %1381 = vmatprep.subr.bf16.mxu0 0
    %1382 = vmatpush1.bf16.msra.mxu0 0
    %1383 = vmatprep.subr.bf16.mxu0 0
    %1384 = vmatpush1.bf16.msra.mxu0 0
    %1385 = vmatprep.subr.bf16.mxu0 0
    %1386 = vmatpush1.bf16.msra.mxu0 0
    %1387 = vmatprep.subr.bf16.mxu0 0
    %1388 = vmatpush1.bf16.msra.mxu0 0
    %1389 = vmatprep.subr.bf16.mxu0 0
    %1390 = vmatpush1.bf16.msra.mxu0 0
    %1391 = vmatprep.subr.bf16.mxu0 0
    %1392 = vmatpush1.bf16.msra.mxu0 0
    %1393 = vmatprep.subr.bf16.mxu0 0
    %1394 = vmatpush1.bf16.msra.mxu0 0
    %1395 = vmatprep.subr.bf16.mxu0 0
    %1396 = vmatpush1.bf16.msra.mxu0 0
    %1397 = vmatprep.mubr.bf16.mxu0 0
    %1398 = vmatmul.mubr.bf16.gmra.mrb[0].mxu0 %v1191
    %v1399 = vpop.f32.mrb[0].mxu0
    %v1400 = vadd.f32 0.0, %v1399
    %v1401 = vpop.f32.mrb[0].mxu0
    %v1402 = vadd.f32 0.0, %v1401
    %v1403 = vpop.f32.mrb[0].mxu0
    %v1404 = vadd.f32 0.0, %v1403
    %v1405 = vpop.f32.mrb[0].mxu0
    %v1406 = vadd.f32 0.0, %v1405
    %1407 = vdwg.mxu0
    %1408 = vmatprep.subr.bf16.mxu0 0
    %1409 = vmatpush1.bf16.msra.mxu0 %v1156
    %1410 = vmatprep.subr.bf16.mxu0 0
    %1411 = vmatpush1.bf16.msra.mxu0 %v1167
    %1412 = vmatprep.subr.bf16.mxu0 0
    %1413 = vmatpush1.bf16.msra.mxu0 0
    %1414 = vmatprep.subr.bf16.mxu0 0
    %1415 = vmatpush1.bf16.msra.mxu0 0
    %1416 = vmatprep.subr.bf16.mxu0 0
    %1417 = vmatpush1.bf16.msra.mxu0 0
    %1418 = vmatprep.subr.bf16.mxu0 0
    %1419 = vmatpush1.bf16.msra.mxu0 0
    %1420 = vmatprep.subr.bf16.mxu0 0
    %1421 = vmatpush1.bf16.msra.mxu0 0
    %1422 = vmatprep.subr.bf16.mxu0 0
    %1423 = vmatpush1.bf16.msra.mxu0 0
    %1424 = vmatprep.subr.bf16.mxu0 0
    %1425 = vmatpush1.bf16.msra.mxu0 0
    %1426 = vmatprep.subr.bf16.mxu0 0
    %1427 = vmatpush1.bf16.msra.mxu0 0
    %1428 = vmatprep.subr.bf16.mxu0 0
    %1429 = vmatpush1.bf16.msra.mxu0 0
    %1430 = vmatprep.subr.bf16.mxu0 0
    %1431 = vmatpush1.bf16.msra.mxu0 0
    %1432 = vmatprep.subr.bf16.mxu0 0
    %1433 = vmatpush1.bf16.msra.mxu0 0
    %1434 = vmatprep.subr.bf16.mxu0 0
    %1435 = vmatpush1.bf16.msra.mxu0 0
    %1436 = vmatprep.subr.bf16.mxu0 0
    %1437 = vmatpush1.bf16.msra.mxu0 0
    %1438 = vmatprep.subr.bf16.mxu0 0
    %1439 = vmatpush1.bf16.msra.mxu0 0
    %1440 = vmatprep.mubr.bf16.mxu0 0
    %1441 = vmatmul.mubr.bf16.gmra.mrb[0].mxu0 %v1191
    %v1442 = vpop.f32.mrb[0].mxu0
    %v1443 = vadd.f32 0.0, %v1442
    %v1444 = vpop.f32.mrb[0].mxu0
    %v1445 = vpop.f32.mrb[0].mxu0
    %v1446 = vadd.f32 0.0, %v1445
    %v1447 = vpop.f32.mrb[0].mxu0
    %1448 = vdwg.mxu0
    %vm1449 = vcmask 72704
    %v1450 = vsel %vm1449, %v1443, -inf
    %1451 = vmax.xlane.f32.xlu0 %v1450
    %v1452 = vpop.xlane.xlu0 %1451
    %v1453 = vsel %vm1449, %v1446, -inf
    %1454 = vmax.xlane.f32.xlu0 %v1453
    %v1455 = vpop.xlane.xlu0 %1454
    %v1456 = vsub.f32 %v1443, %v1452
    %v1457 = vsub.f32 %v1446, %v1455
    %v1458 = vmul.f32 %v1456, 1.442695
    %v1459 = vpow.pop %v1458
    %v1460 = vmul.f32 %v1457, 1.442695
    %v1461 = vpow.pop %v1460
    %v1462 = vsel %vm1449, %v1459, 0.0
    %1463 = vadd.xlane.f32.xlu0 %v1462
    %v1464 = vpop.xlane.xlu0 %1463
    %v1465 = vsel %vm1449, %v1461, 0.0
    %1466 = vadd.xlane.f32.xlu0 %v1465
    %v1467 = vpop.xlane.xlu0 %1466
    %v1468 = vrcp.pop %v1464
    %v1469 = vrcp.pop %v1467
    %v1470 = vmul.f32 %v1459, %v1468
    %v1471 = vmul.f32 %v1461, %v1469
    %v1472 = vlaneseq
    %v1473 = vand.u32 %v1472, 127
    %v1474 = vsel %vm1449, %v1470, -inf
    %1475 = vmax.xlane.f32.xlu0 %v1474
    %v1476 = vpop.xlane.xlu0 %1475
    %v1477 = vsel %vm1449, %v1471, -inf
    %1478 = vmax.xlane.f32.xlu0 %v1477
    %v1479 = vpop.xlane.xlu0 %1478
    %vm1480 = vcmp.eq.f32.partialorder %v1470, %v1476
    %vm1481 = vcmp.eq.f32.partialorder %v1471, %v1479
    %v1482 = vsel %vm1480, %v1473, 9
    %v1483 = vsel %vm1481, %v1473, 9
    %v1484 = vsel %vm1449, %v1482, 2147483647
    %v1485 = vand.u32 %v1484, 65535
    %v1486 = vshra.s32 %v1484, 16
    %v1487 = vcvt.s32.f32 %v1485
    %v1488 = vcvt.s32.f32 %v1486
    %1489 = vmin.xlane.f32.xlu0 %v1488
    %v1490 = vpop.xlane.xlu0 %1489
    %vm1491 = vcmp.eq.f32.partialorder %v1488, %v1490
    %v1492 = vsel %vm1491, %v1487, inf
    %1493 = vmin.xlane.f32.xlu0 %v1492
    %v1494 = vpop.xlane.xlu0 %1493
    %v1495 = vcvt.f32.s32 %v1494
    %v1496 = vcvt.f32.s32 %v1490
    %v1497 = vshll.u32 %v1496, 16
    %v1498 = vadd.s32 %v1497, %v1495
    %v1499 = vsel %vm1449, %v1483, 2147483647
    %v1500 = vand.u32 %v1499, 65535
    %v1501 = vshra.s32 %v1499, 16
    %v1502 = vcvt.s32.f32 %v1500
    %v1503 = vcvt.s32.f32 %v1501
    %1504 = vmin.xlane.f32.xlu0 %v1503
    %v1505 = vpop.xlane.xlu0 %1504
    %vm1506 = vcmp.eq.f32.partialorder %v1503, %v1505
    %v1507 = vsel %vm1506, %v1502, inf
    %1508 = vmin.xlane.f32.xlu0 %v1507
    %v1509 = vpop.xlane.xlu0 %1508
    %v1510 = vcvt.f32.s32 %v1509
    %v1511 = vcvt.f32.s32 %v1505
    %v1512 = vshll.u32 %v1511, 16
    %v1513 = vadd.s32 %v1512, %v1510
    %vm1514 = vcmp.eq.s32.totalorder %v1473, %v1498
    %vm1515 = vcmp.eq.s32.totalorder %v1473, %v1513
    %v1516 = vsel %vm1514, -1.0, %v1470
    %v1517 = vsel %vm1515, -1.0, %v1471
    %v1518 = vsel %vm1449, %v1516, -inf
    %1519 = vmax.xlane.f32.xlu0 %v1518
    %v1520 = vpop.xlane.xlu0 %1519
    %v1521 = vsel %vm1449, %v1517, -inf
    %1522 = vmax.xlane.f32.xlu0 %v1521
    %v1523 = vpop.xlane.xlu0 %1522
    %vm1524 = vcmp.eq.f32.partialorder %v1516, %v1520
    %vm1525 = vcmp.eq.f32.partialorder %v1517, %v1523
    %v1526 = vsel %vm1524, %v1473, 9
    %v1527 = vsel %vm1525, %v1473, 9
    %v1528 = vsel %vm1449, %v1526, 2147483647
    %v1529 = vand.u32 %v1528, 65535
    %v1530 = vshra.s32 %v1528, 16
    %v1531 = vcvt.s32.f32 %v1529
    %v1532 = vcvt.s32.f32 %v1530
    %1533 = vmin.xlane.f32.xlu0 %v1532
    %v1534 = vpop.xlane.xlu0 %1533
    %vm1535 = vcmp.eq.f32.partialorder %v1532, %v1534
    %v1536 = vsel %vm1535, %v1531, inf
    %1537 = vmin.xlane.f32.xlu0 %v1536
    %v1538 = vpop.xlane.xlu0 %1537
    %v1539 = vcvt.f32.s32 %v1538
    %v1540 = vcvt.f32.s32 %v1534
    %v1541 = vshll.u32 %v1540, 16
    %v1542 = vadd.s32 %v1541, %v1539
    %v1543 = vsel %vm1449, %v1527, 2147483647
    %v1544 = vand.u32 %v1543, 65535
    %v1545 = vshra.s32 %v1543, 16
    %v1546 = vcvt.s32.f32 %v1544
    %v1547 = vcvt.s32.f32 %v1545
    %1548 = vmin.xlane.f32.xlu0 %v1547
    %v1549 = vpop.xlane.xlu0 %1548
    %vm1550 = vcmp.eq.f32.partialorder %v1547, %v1549
    %v1551 = vsel %vm1550, %v1546, inf
    %1552 = vmin.xlane.f32.xlu0 %v1551
    %v1553 = vpop.xlane.xlu0 %1552
    %v1554 = vcvt.f32.s32 %v1553
    %v1555 = vcvt.f32.s32 %v1549
    %v1556 = vshll.u32 %v1555, 16
    %v1557 = vadd.s32 %v1556, %v1554
    %v1558 = vadd.f32 %v1476, %v1520
    %v1559 = vadd.f32 %v1479, %v1523
    %v1560 = vrcp.pop %v1558
    %v1561 = vrcp.pop %v1559
    %v1562 = vmul.f32 %v1476, %v1560
    %v1563 = vmul.f32 %v1479, %v1561
    %v1564 = vmul.f32 %v1520, %v1560
    %v1565 = vmul.f32 %v1523, %v1561
    %v1566 = vadd.s32 %v1473, 128
    %v1567 = vadd.s32 %v1473, 256
    %v1568 = vadd.s32 %v1473, 384
    %v1569 = vadd.s32 %v1473, 512
    %v1570 = vmul.u32 %v1498, 64
    %v1571 = vmul.u32 %v1513, 64
    %v1572 = vmul.u32 %v1542, 64
    %v1573 = vmul.u32 %v1557, 64
    %vm1574 = vcmp.ge.s32.totalorder %v1473, %v1570
    %vm1575 = vcmp.ge.s32.totalorder %v1566, %v1570
    %vm1576 = vcmp.ge.s32.totalorder %v1567, %v1570
    %vm1577 = vcmp.ge.s32.totalorder %v1568, %v1570
    %vm1578 = vcmp.ge.s32.totalorder %v1569, %v1570
    %vm1579 = vcmp.ge.s32.totalorder %v1473, %v1571
    %vm1580 = vcmp.ge.s32.totalorder %v1566, %v1571
    %vm1581 = vcmp.ge.s32.totalorder %v1567, %v1571
    %vm1582 = vcmp.ge.s32.totalorder %v1568, %v1571
    %vm1583 = vcmp.ge.s32.totalorder %v1569, %v1571
    %v1584 = vadd.s32 %v1570, 64
    %v1585 = vadd.s32 %v1571, 64
    %vm1586 = vcmp.lt.s32.totalorder %v1473, %v1584
    %vm1587 = vcmp.lt.s32.totalorder %v1566, %v1584
    %vm1588 = vcmp.lt.s32.totalorder %v1567, %v1584
    %vm1589 = vcmp.lt.s32.totalorder %v1568, %v1584
    %vm1590 = vcmp.lt.s32.totalorder %v1569, %v1584
    %vm1591 = vcmp.lt.s32.totalorder %v1473, %v1585
    %vm1592 = vcmp.lt.s32.totalorder %v1566, %v1585
    %vm1593 = vcmp.lt.s32.totalorder %v1567, %v1585
    %vm1594 = vcmp.lt.s32.totalorder %v1568, %v1585
    %vm1595 = vcmp.lt.s32.totalorder %v1569, %v1585
    %vm1596 = vmand %vm1574, %vm1586
    %vm1597 = vmand %vm1575, %vm1587
    %vm1598 = vmand %vm1576, %vm1588
    %vm1599 = vmand %vm1577, %vm1589
    %vm1600 = vmand %vm1578, %vm1590
    %vm1601 = vmand %vm1579, %vm1591
    %vm1602 = vmand %vm1580, %vm1592
    %vm1603 = vmand %vm1581, %vm1593
    %vm1604 = vmand %vm1582, %vm1594
    %vm1605 = vmand %vm1583, %vm1595
    %v1606 = vsel %vm1596, %v1562, 0.0
    %v1607 = vsel %vm1597, %v1562, 0.0
    %v1608 = vsel %vm1598, %v1562, 0.0
    %v1609 = vsel %vm1599, %v1562, 0.0
    %v1610 = vsel %vm1600, %v1562, 0.0
    %v1611 = vsel %vm1601, %v1563, 0.0
    %v1612 = vsel %vm1602, %v1563, 0.0
    %v1613 = vsel %vm1603, %v1563, 0.0
    %v1614 = vsel %vm1604, %v1563, 0.0
    %v1615 = vsel %vm1605, %v1563, 0.0
    %vm1616 = vcmp.ge.s32.totalorder %v1473, %v1572
    %vm1617 = vcmp.ge.s32.totalorder %v1566, %v1572
    %vm1618 = vcmp.ge.s32.totalorder %v1567, %v1572
    %vm1619 = vcmp.ge.s32.totalorder %v1568, %v1572
    %vm1620 = vcmp.ge.s32.totalorder %v1569, %v1572
    %vm1621 = vcmp.ge.s32.totalorder %v1473, %v1573
    %vm1622 = vcmp.ge.s32.totalorder %v1566, %v1573
    %vm1623 = vcmp.ge.s32.totalorder %v1567, %v1573
    %vm1624 = vcmp.ge.s32.totalorder %v1568, %v1573
    %vm1625 = vcmp.ge.s32.totalorder %v1569, %v1573
    %v1626 = vadd.s32 %v1572, 64
    %v1627 = vadd.s32 %v1573, 64
    %vm1628 = vcmp.lt.s32.totalorder %v1473, %v1626
    %vm1629 = vcmp.lt.s32.totalorder %v1566, %v1626
    %vm1630 = vcmp.lt.s32.totalorder %v1567, %v1626
    %vm1631 = vcmp.lt.s32.totalorder %v1568, %v1626
    %vm1632 = vcmp.lt.s32.totalorder %v1569, %v1626
    %vm1633 = vcmp.lt.s32.totalorder %v1473, %v1627
    %vm1634 = vcmp.lt.s32.totalorder %v1566, %v1627
    %vm1635 = vcmp.lt.s32.totalorder %v1567, %v1627
    %vm1636 = vcmp.lt.s32.totalorder %v1568, %v1627
    %vm1637 = vcmp.lt.s32.totalorder %v1569, %v1627
    %vm1638 = vmand %vm1616, %vm1628
    %vm1639 = vmand %vm1617, %vm1629
    %vm1640 = vmand %vm1618, %vm1630
    %vm1641 = vmand %vm1619, %vm1631
    %vm1642 = vmand %vm1620, %vm1632
    %vm1643 = vmand %vm1621, %vm1633
    %vm1644 = vmand %vm1622, %vm1634
    %vm1645 = vmand %vm1623, %vm1635
    %vm1646 = vmand %vm1624, %vm1636
    %vm1647 = vmand %vm1625, %vm1637
    %v1648 = vsel %vm1638, %v1564, 0.0
    %v1649 = vsel %vm1639, %v1564, 0.0
    %v1650 = vsel %vm1640, %v1564, 0.0
    %v1651 = vsel %vm1641, %v1564, 0.0
    %v1652 = vsel %vm1642, %v1564, 0.0
    %v1653 = vsel %vm1643, %v1565, 0.0
    %v1654 = vsel %vm1644, %v1565, 0.0
    %v1655 = vsel %vm1645, %v1565, 0.0
    %v1656 = vsel %vm1646, %v1565, 0.0
    %v1657 = vsel %vm1647, %v1565, 0.0
    %v1658 = vadd.f32 %v1606, %v1648
    %v1659 = vadd.f32 %v1607, %v1649
    %v1660 = vadd.f32 %v1608, %v1650
    %v1661 = vadd.f32 %v1609, %v1651
    %v1662 = vadd.f32 %v1610, %v1652
    %v1663 = vadd.f32 %v1611, %v1653
    %v1664 = vadd.f32 %v1612, %v1654
    %v1665 = vadd.f32 %v1613, %v1655
    %v1666 = vadd.f32 %v1614, %v1656
    %v1667 = vadd.f32 %v1615, %v1657
    %v1668 = vsub.f32 0.0, %v1228
    %v1669 = vsub.f32 0.0, %v1230
    %v1670 = vsub.f32 0.0, %v1271
    %v1671 = vsub.f32 0.0, %v1273
    %v1672 = vsub.f32 0.0, %v1314
    %v1673 = vsub.f32 0.0, %v1232
    %v1674 = vsub.f32 0.0, %v1234
    %v1675 = vsub.f32 0.0, %v1275
    %v1676 = vsub.f32 0.0, %v1277
    %v1677 = vsub.f32 0.0, %v1318
    %v1678 = vmul.f32 %v1668, 1.442695
    %v1679 = vpow.pop %v1678
    %v1680 = vmul.f32 %v1669, 1.442695
    %v1681 = vpow.pop %v1680
    %v1682 = vmul.f32 %v1670, 1.442695
    %v1683 = vpow.pop %v1682
    %v1684 = vmul.f32 %v1671, 1.442695
    %v1685 = vpow.pop %v1684
    %v1686 = vmul.f32 %v1672, 1.442695
    %v1687 = vpow.pop %v1686
    %v1688 = vmul.f32 %v1673, 1.442695
    %v1689 = vpow.pop %v1688
    %v1690 = vmul.f32 %v1674, 1.442695
    %v1691 = vpow.pop %v1690
    %v1692 = vmul.f32 %v1675, 1.442695
    %v1693 = vpow.pop %v1692
    %v1694 = vmul.f32 %v1676, 1.442695
    %v1695 = vpow.pop %v1694
    %v1696 = vmul.f32 %v1677, 1.442695
    %v1697 = vpow.pop %v1696
    %v1698 = vadd.f32 %v1679, 1.0
    %v1699 = vadd.f32 %v1681, 1.0
    %v1700 = vadd.f32 %v1683, 1.0
    %v1701 = vadd.f32 %v1685, 1.0
    %v1702 = vadd.f32 %v1687, 1.0
    %v1703 = vadd.f32 %v1689, 1.0
    %v1704 = vadd.f32 %v1691, 1.0
    %v1705 = vadd.f32 %v1693, 1.0
    %v1706 = vadd.f32 %v1695, 1.0
    %v1707 = vadd.f32 %v1697, 1.0
    %v1708 = vrcp.pop %v1698
    %v1709 = vrcp.pop %v1699
    %v1710 = vrcp.pop %v1700
    %v1711 = vrcp.pop %v1701
    %v1712 = vrcp.pop %v1702
    %v1713 = vrcp.pop %v1703
    %v1714 = vrcp.pop %v1704
    %v1715 = vrcp.pop %v1705
    %v1716 = vrcp.pop %v1706
    %v1717 = vrcp.pop %v1707
    %v1718 = vmul.f32 %v1228, %v1708
    %v1719 = vmul.f32 %v1230, %v1709
    %v1720 = vmul.f32 %v1271, %v1710
    %v1721 = vmul.f32 %v1273, %v1711
    %v1722 = vmul.f32 %v1314, %v1712
    %v1723 = vmul.f32 %v1232, %v1713
    %v1724 = vmul.f32 %v1234, %v1714
    %v1725 = vmul.f32 %v1275, %v1715
    %v1726 = vmul.f32 %v1277, %v1716
    %v1727 = vmul.f32 %v1318, %v1717
    %v1728 = vmul.f32 %v1718, %v1316
    %v1729 = vmul.f32 %v1719, %v1357
    %v1730 = vmul.f32 %v1720, %v1359
    %v1731 = vmul.f32 %v1721, %v1400
    %v1732 = vmul.f32 %v1722, %v1402
    %v1733 = vmul.f32 %v1723, %v1320
    %v1734 = vmul.f32 %v1724, %v1361
    %v1735 = vmul.f32 %v1725, %v1363
    %v1736 = vmul.f32 %v1726, %v1404
    %v1737 = vmul.f32 %v1727, %v1406
    %v1738 = vmul.f32 %v1728, %v1658
    %v1739 = vmul.f32 %v1729, %v1659
    %v1740 = vmul.f32 %v1730, %v1660
    %v1741 = vmul.f32 %v1731, %v1661
    %v1742 = vmul.f32 %v1732, %v1662
    %v1743 = vmul.f32 %v1733, %v1663
    %v1744 = vmul.f32 %v1734, %v1664
    %v1745 = vmul.f32 %v1735, %v1665
    %v1746 = vmul.f32 %v1736, %v1666
    %v1747 = vmul.f32 %v1737, %v1667
    %v1748 = vpack.c.bf16 %v1743, %v1738
    %v1749 = vpack.c.bf16 %v1744, %v1739
    %v1750 = vpack.c.bf16 %v1745, %v1740
    %v1751 = vpack.c.bf16 %v1746, %v1741
    %v1752 = vpack.c.bf16 %v1747, %v1742
    %v1753 = vld [vmem:[%s2] sm:$0xf]
    %v1754 = vld [vmem:[%s2 + $0x4] sm:$0xf]
    %v1755 = vld [vmem:[%s2 + $0x8] sm:$0xf]
    %v1756 = vld [vmem:[%s2 + $0xc] sm:$0xf]
    %v1757 = vld [vmem:[%s2 + $0x10] sm:$0xf]
    %v1758 = vld [vmem:[%s2 + $0x14] sm:$0xf]
    %v1759 = vld [vmem:[%s2 + $0x18] sm:$0xf]
    %v1760 = vld [vmem:[%s2 + $0x1c] sm:$0xf]
    %v1761 = vld [vmem:[%s2 + $0x20] sm:$0xf]
    %v1762 = vld [vmem:[%s2 + $0x24] sm:$0xf]
    %v1763 = vld [vmem:[%s2 + $0x28] sm:$0xf]
    %v1764 = vld [vmem:[%s2 + $0x2c] sm:$0xf]
    %v1765 = vld [vmem:[%s2 + $0x30] sm:$0xf]
    %v1766 = vld [vmem:[%s2 + $0x34] sm:$0xf]
    %v1767 = vld [vmem:[%s2 + $0x38] sm:$0xf]
    %v1768 = vld [vmem:[%s2 + $0x3c] sm:$0xf]
    %v1769 = vld [vmem:[%s2 + $0x40] sm:$0xf]
    %v1770 = vld [vmem:[%s2 + $0x44] sm:$0xf]
    %v1771 = vld [vmem:[%s2 + $0x48] sm:$0xf]
    %v1772 = vld [vmem:[%s2 + $0x4c] sm:$0xf]
    %v1773 = vld [vmem:[%s2 + $0x50] sm:$0xf]
    %v1774 = vld [vmem:[%s2 + $0x54] sm:$0xf]
    %v1775 = vld [vmem:[%s2 + $0x58] sm:$0xf]
    %v1776 = vld [vmem:[%s2 + $0x5c] sm:$0xf]
    %v1777 = vld [vmem:[%s2 + $0x60] sm:$0xf]
    %v1778 = vld [vmem:[%s2 + $0x64] sm:$0xf]
    %v1779 = vld [vmem:[%s2 + $0x68] sm:$0xf]
    %v1780 = vld [vmem:[%s2 + $0x6c] sm:$0xf]
    %v1781 = vld [vmem:[%s2 + $0x70] sm:$0xf]
    %v1782 = vld [vmem:[%s2 + $0x74] sm:$0xf]
    %v1783 = vld [vmem:[%s2 + $0x78] sm:$0xf]
    %v1784 = vld [vmem:[%s2 + $0x7c] sm:$0xf]
    %v1785 = vld [vmem:[%s2 + $0x80] sm:$0xf]
    %v1786 = vld [vmem:[%s2 + $0x84] sm:$0xf]
    %v1787 = vld [vmem:[%s2 + $0x88] sm:$0xf]
    %v1788 = vld [vmem:[%s2 + $0x8c] sm:$0xf]
    %v1789 = vld [vmem:[%s2 + $0x90] sm:$0xf]
    %v1790 = vld [vmem:[%s2 + $0x94] sm:$0xf]
    %v1791 = vld [vmem:[%s2 + $0x98] sm:$0xf]
    %v1792 = vld [vmem:[%s2 + $0x9c] sm:$0xf]
    %v1793 = vld [vmem:[%s2 + $0xa0] sm:$0xf]
    %v1794 = vld [vmem:[%s2 + $0xa4] sm:$0xf]
    %v1795 = vld [vmem:[%s2 + $0xa8] sm:$0xf]
    %v1796 = vld [vmem:[%s2 + $0xac] sm:$0xf]
    %v1797 = vld [vmem:[%s2 + $0xb0] sm:$0xf]
    %v1798 = vld [vmem:[%s2 + $0xb4] sm:$0xf]
    %v1799 = vld [vmem:[%s2 + $0xb8] sm:$0xf]
    %v1800 = vld [vmem:[%s2 + $0xbc] sm:$0xf]
    %v1801 = vld [vmem:[%s2 + $0xc0] sm:$0xf]
    %v1802 = vld [vmem:[%s2 + $0xc4] sm:$0xf]
    %v1803 = vld [vmem:[%s2 + $0xc8] sm:$0xf]
    %v1804 = vld [vmem:[%s2 + $0xcc] sm:$0xf]
    %v1805 = vld [vmem:[%s2 + $0xd0] sm:$0xf]
    %v1806 = vld [vmem:[%s2 + $0xd4] sm:$0xf]
    %v1807 = vld [vmem:[%s2 + $0xd8] sm:$0xf]
    %v1808 = vld [vmem:[%s2 + $0xdc] sm:$0xf]
    %v1809 = vld [vmem:[%s2 + $0xe0] sm:$0xf]
    %v1810 = vld [vmem:[%s2 + $0xe4] sm:$0xf]
    %v1811 = vld [vmem:[%s2 + $0xe8] sm:$0xf]
    %v1812 = vld [vmem:[%s2 + $0xec] sm:$0xf]
    %v1813 = vld [vmem:[%s2 + $0xf0] sm:$0xf]
    %v1814 = vld [vmem:[%s2 + $0xf4] sm:$0xf]
    %v1815 = vld [vmem:[%s2 + $0xf8] sm:$0xf]
    %v1816 = vld [vmem:[%s2 + $0xfc] sm:$0xf]
    %v1817 = vld [vmem:[%s2 + $0x100] sm:$0xf]
    %v1818 = vld [vmem:[%s2 + $0x104] sm:$0xf]
    %v1819 = vld [vmem:[%s2 + $0x108] sm:$0xf]
    %v1820 = vld [vmem:[%s2 + $0x10c] sm:$0xf]
    %v1821 = vld [vmem:[%s2 + $0x110] sm:$0xf]
    %v1822 = vld [vmem:[%s2 + $0x114] sm:$0xf]
    %v1823 = vld [vmem:[%s2 + $0x118] sm:$0xf]
    %v1824 = vld [vmem:[%s2 + $0x11c] sm:$0xf]
    %v1897 = vunpack.c.l.b16 %v1753
    %v1898 = vunpack.c.l.b16 %v1754
    %v1899 = vunpack.c.l.b16 %v1755
    %v1900 = vunpack.c.l.b16 %v1756
    %v1901 = vunpack.c.l.b16 %v1757
    %v1902 = vunpack.c.l.b16 %v1758
    %v1903 = vunpack.c.l.b16 %v1759
    %v1904 = vunpack.c.l.b16 %v1760
    %v1905 = vunpack.c.l.b16 %v1761
    %v1906 = vunpack.c.l.b16 %v1762
    %v1907 = vunpack.c.l.b16 %v1763
    %v1908 = vunpack.c.l.b16 %v1764
    %v1909 = vunpack.c.l.b16 %v1765
    %v1910 = vunpack.c.l.b16 %v1766
    %v1911 = vunpack.c.l.b16 %v1767
    %v1912 = vunpack.c.l.b16 %v1768
    %v1913 = vunpack.c.l.b16 %v1769
    %v1914 = vunpack.c.l.b16 %v1770
    %v1915 = vunpack.c.l.b16 %v1771
    %v1916 = vunpack.c.l.b16 %v1772
    %v1917 = vunpack.c.l.b16 %v1773
    %v1918 = vunpack.c.l.b16 %v1774
    %v1919 = vunpack.c.l.b16 %v1775
    %v1920 = vunpack.c.l.b16 %v1776
    %v1921 = vunpack.c.l.b16 %v1777
    %v1922 = vunpack.c.l.b16 %v1778
    %v1923 = vunpack.c.l.b16 %v1779
    %v1924 = vunpack.c.l.b16 %v1780
    %v1925 = vunpack.c.l.b16 %v1781
    %v1926 = vunpack.c.l.b16 %v1782
    %v1927 = vunpack.c.l.b16 %v1783
    %v1928 = vunpack.c.l.b16 %v1784
    %v1929 = vunpack.c.l.b16 %v1785
    %v1930 = vunpack.c.l.b16 %v1786
    %v1931 = vunpack.c.l.b16 %v1787
    %v1932 = vunpack.c.l.b16 %v1788
    %v1933 = vunpack.c.l.b16 %v1789
    %v1934 = vunpack.c.l.b16 %v1790
    %v1935 = vunpack.c.l.b16 %v1791
    %v1936 = vunpack.c.l.b16 %v1792
    %v1937 = vunpack.c.l.b16 %v1793
    %v1938 = vunpack.c.l.b16 %v1794
    %v1939 = vunpack.c.l.b16 %v1795
    %v1940 = vunpack.c.l.b16 %v1796
    %v1941 = vunpack.c.l.b16 %v1797
    %v1942 = vunpack.c.l.b16 %v1798
    %v1943 = vunpack.c.l.b16 %v1799
    %v1944 = vunpack.c.l.b16 %v1800
    %v1945 = vunpack.c.l.b16 %v1801
    %v1946 = vunpack.c.l.b16 %v1802
    %v1947 = vunpack.c.l.b16 %v1803
    %v1948 = vunpack.c.l.b16 %v1804
    %v1949 = vunpack.c.l.b16 %v1805
    %v1950 = vunpack.c.l.b16 %v1806
    %v1951 = vunpack.c.l.b16 %v1807
    %v1952 = vunpack.c.l.b16 %v1808
    %v1953 = vunpack.c.l.b16 %v1809
    %v1954 = vunpack.c.l.b16 %v1810
    %v1955 = vunpack.c.l.b16 %v1811
    %v1956 = vunpack.c.l.b16 %v1812
    %v1957 = vunpack.c.l.b16 %v1813
    %v1958 = vunpack.c.l.b16 %v1814
    %v1959 = vunpack.c.l.b16 %v1815
    %v1960 = vunpack.c.l.b16 %v1816
    %v1961 = vunpack.c.l.b16 %v1817
    %v1962 = vunpack.c.l.b16 %v1818
    %v1963 = vunpack.c.l.b16 %v1819
    %v1964 = vunpack.c.l.b16 %v1820
    %v1965 = vunpack.c.l.b16 %v1821
    %v1966 = vunpack.c.l.b16 %v1822
    %v1967 = vunpack.c.l.b16 %v1823
    %v1968 = vunpack.c.l.b16 %v1824
    %v1969 = vpack.c.b16 %v1898, %v1897
    %v1970 = vpack.c.b16 %v1900, %v1899
    %v1971 = vpack.c.b16 %v1902, %v1901
    %v1972 = vpack.c.b16 %v1904, %v1903
    %v1973 = vpack.c.b16 %v1906, %v1905
    %v1974 = vpack.c.b16 %v1908, %v1907
    %v1975 = vpack.c.b16 %v1910, %v1909
    %v1976 = vpack.c.b16 %v1912, %v1911
    %v1977 = vpack.c.b16 %v1914, %v1913
    %v1978 = vpack.c.b16 %v1916, %v1915
    %v1979 = vpack.c.b16 %v1918, %v1917
    %v1980 = vpack.c.b16 %v1920, %v1919
    %v1981 = vpack.c.b16 %v1922, %v1921
    %v1982 = vpack.c.b16 %v1924, %v1923
    %v1983 = vpack.c.b16 %v1926, %v1925
    %v1984 = vpack.c.b16 %v1928, %v1927
    %v1985 = vpack.c.b16 %v1930, %v1929
    %v1986 = vpack.c.b16 %v1932, %v1931
    %v1987 = vpack.c.b16 %v1934, %v1933
    %v1988 = vpack.c.b16 %v1936, %v1935
    %v1989 = vpack.c.b16 %v1938, %v1937
    %v1990 = vpack.c.b16 %v1940, %v1939
    %v1991 = vpack.c.b16 %v1942, %v1941
    %v1992 = vpack.c.b16 %v1944, %v1943
    %v1993 = vpack.c.b16 %v1946, %v1945
    %v1994 = vpack.c.b16 %v1948, %v1947
    %v1995 = vpack.c.b16 %v1950, %v1949
    %v1996 = vpack.c.b16 %v1952, %v1951
    %v1997 = vpack.c.b16 %v1954, %v1953
    %v1998 = vpack.c.b16 %v1956, %v1955
    %v1999 = vpack.c.b16 %v1958, %v1957
    %v2000 = vpack.c.b16 %v1960, %v1959
    %v2001 = vpack.c.b16 %v1962, %v1961
    %v2002 = vpack.c.b16 %v1964, %v1963
    %v2003 = vpack.c.b16 %v1966, %v1965
    %v2004 = vpack.c.b16 %v1968, %v1967
    %vm2041 = vcmask 523264
    %v2043 = vsel %vm2041, %v1752, 0
    %2045 = vmatprep.subr.bf16.mxu0 0
    %2046 = vmatpush1.bf16.msra.mxu0 %v1969
    %2047 = vmatprep.subr.bf16.mxu0 0
    %2048 = vmatpush1.bf16.msra.mxu0 %v1970
    %2049 = vmatprep.subr.bf16.mxu0 0
    %2050 = vmatpush1.bf16.msra.mxu0 %v1971
    %2051 = vmatprep.subr.bf16.mxu0 0
    %2052 = vmatpush1.bf16.msra.mxu0 %v1972
    %2053 = vmatprep.subr.bf16.mxu0 0
    %2054 = vmatpush1.bf16.msra.mxu0 %v1973
    %2055 = vmatprep.subr.bf16.mxu0 0
    %2056 = vmatpush1.bf16.msra.mxu0 %v1974
    %2057 = vmatprep.subr.bf16.mxu0 0
    %2058 = vmatpush1.bf16.msra.mxu0 %v1975
    %2059 = vmatprep.subr.bf16.mxu0 0
    %2060 = vmatpush1.bf16.msra.mxu0 %v1976
    %2061 = vmatprep.subr.bf16.mxu0 0
    %2062 = vmatpush1.bf16.msra.mxu0 %v1977
    %2063 = vmatprep.subr.bf16.mxu0 0
    %2064 = vmatpush1.bf16.msra.mxu0 %v1978
    %2065 = vmatprep.subr.bf16.mxu0 0
    %2066 = vmatpush1.bf16.msra.mxu0 %v1979
    %2067 = vmatprep.subr.bf16.mxu0 0
    %2068 = vmatpush1.bf16.msra.mxu0 %v1980
    %2069 = vmatprep.subr.bf16.mxu0 0
    %2070 = vmatpush1.bf16.msra.mxu0 %v1981
    %2071 = vmatprep.subr.bf16.mxu0 0
    %2072 = vmatpush1.bf16.msra.mxu0 %v1982
    %2073 = vmatprep.subr.bf16.mxu0 0
    %2074 = vmatpush1.bf16.msra.mxu0 %v1983
    %2075 = vmatprep.subr.bf16.mxu0 0
    %2076 = vmatpush1.bf16.msra.mxu0 %v1984
    %2077 = vmatprep.mubr.bf16.mxu0 %v1749
    %2078 = vmatmul.mubr.bf16.gmra.mrb[0].mxu0 %v1748
    %v2079 = vpop.f32.mrb[0].mxu0
    %v2080 = vadd.f32 0.0, %v2079
    %v2081 = vpop.f32.mrb[0].mxu0
    %v2082 = vpop.f32.mrb[0].mxu0
    %v2083 = vadd.f32 0.0, %v2082
    %v2084 = vpop.f32.mrb[0].mxu0
    %2085 = vdwg.mxu0
    %2086 = vmatprep.subr.bf16.mxu0 0
    %2087 = vmatpush1.bf16.msra.mxu0 %v1985
    %2088 = vmatprep.subr.bf16.mxu0 0
    %2089 = vmatpush1.bf16.msra.mxu0 %v1986
    %2090 = vmatprep.subr.bf16.mxu0 0
    %2091 = vmatpush1.bf16.msra.mxu0 %v1987
    %2092 = vmatprep.subr.bf16.mxu0 0
    %2093 = vmatpush1.bf16.msra.mxu0 %v1988
    %2094 = vmatprep.subr.bf16.mxu0 0
    %2095 = vmatpush1.bf16.msra.mxu0 %v1989
    %2096 = vmatprep.subr.bf16.mxu0 0
    %2097 = vmatpush1.bf16.msra.mxu0 %v1990
    %2098 = vmatprep.subr.bf16.mxu0 0
    %2099 = vmatpush1.bf16.msra.mxu0 %v1991
    %2100 = vmatprep.subr.bf16.mxu0 0
    %2101 = vmatpush1.bf16.msra.mxu0 %v1992
    %2102 = vmatprep.subr.bf16.mxu0 0
    %2103 = vmatpush1.bf16.msra.mxu0 %v1993
    %2104 = vmatprep.subr.bf16.mxu0 0
    %2105 = vmatpush1.bf16.msra.mxu0 %v1994
    %2106 = vmatprep.subr.bf16.mxu0 0
    %2107 = vmatpush1.bf16.msra.mxu0 %v1995
    %2108 = vmatprep.subr.bf16.mxu0 0
    %2109 = vmatpush1.bf16.msra.mxu0 %v1996
    %2110 = vmatprep.subr.bf16.mxu0 0
    %2111 = vmatpush1.bf16.msra.mxu0 %v1997
    %2112 = vmatprep.subr.bf16.mxu0 0
    %2113 = vmatpush1.bf16.msra.mxu0 %v1998
    %2114 = vmatprep.subr.bf16.mxu0 0
    %2115 = vmatpush1.bf16.msra.mxu0 %v1999
    %2116 = vmatprep.subr.bf16.mxu0 0
    %2117 = vmatpush1.bf16.msra.mxu0 %v2000
    %2118 = vmatprep.mubr.bf16.mxu0 %v1751
    %2119 = vmatmul.mubr.bf16.gmra.mrb[0].mxu0 %v1750
    %v2120 = vpop.f32.mrb[0].mxu0
    %v2121 = vadd.f32 %v2080, %v2120
    %v2122 = vpop.f32.mrb[0].mxu0
    %v2123 = vpop.f32.mrb[0].mxu0
    %v2124 = vadd.f32 %v2083, %v2123
    %v2125 = vpop.f32.mrb[0].mxu0
    %2126 = vdwg.mxu0
    %2127 = vmatprep.subr.bf16.mxu0 0
    %2128 = vmatpush1.bf16.msra.mxu0 %v2001
    %2129 = vmatprep.subr.bf16.mxu0 0
    %2130 = vmatpush1.bf16.msra.mxu0 %v2002
    %2131 = vmatprep.subr.bf16.mxu0 0
    %2132 = vmatpush1.bf16.msra.mxu0 %v2003
    %2133 = vmatprep.subr.bf16.mxu0 0
    %2134 = vmatpush1.bf16.msra.mxu0 %v2004
    %2135 = vmatprep.subr.bf16.mxu0 0
    %2136 = vmatpush1.bf16.msra.mxu0 0
    %2137 = vmatprep.subr.bf16.mxu0 0
    %2138 = vmatpush1.bf16.msra.mxu0 0
    %2139 = vmatprep.subr.bf16.mxu0 0
    %2140 = vmatpush1.bf16.msra.mxu0 0
    %2141 = vmatprep.subr.bf16.mxu0 0
    %2142 = vmatpush1.bf16.msra.mxu0 0
    %2143 = vmatprep.subr.bf16.mxu0 0
    %2144 = vmatpush1.bf16.msra.mxu0 0
    %2145 = vmatprep.subr.bf16.mxu0 0
    %2146 = vmatpush1.bf16.msra.mxu0 0
    %2147 = vmatprep.subr.bf16.mxu0 0
    %2148 = vmatpush1.bf16.msra.mxu0 0
    %2149 = vmatprep.subr.bf16.mxu0 0
    %2150 = vmatpush1.bf16.msra.mxu0 0
    %2151 = vmatprep.subr.bf16.mxu0 0
    %2152 = vmatpush1.bf16.msra.mxu0 0
    %2153 = vmatprep.subr.bf16.mxu0 0
    %2154 = vmatpush1.bf16.msra.mxu0 0
    %2155 = vmatprep.subr.bf16.mxu0 0
    %2156 = vmatpush1.bf16.msra.mxu0 0
    %2157 = vmatprep.subr.bf16.mxu0 0
    %2158 = vmatpush1.bf16.msra.mxu0 0
    %2159 = vmatprep.mubr.bf16.mxu0 0
    %2160 = vmatmul.mubr.bf16.gmra.mrb[0].mxu0 %v2043
    %v2161 = vpop.f32.mrb[0].mxu0
    %v2162 = vadd.f32 %v2121, %v2161
    %v2163 = vpop.f32.mrb[0].mxu0
    %v2164 = vpop.f32.mrb[0].mxu0
    %v2165 = vadd.f32 %v2124, %v2164
    %v2166 = vpop.f32.mrb[0].mxu0
    %2167 = vdwg.mxu0
    %v2168 = vadd.f32 %v1035, %v2162
    %v2169 = vadd.f32 %v1036, %v2165
    %2170 = vst.msk [vmem:[#allocation2] sm:$0xff] %vm24, %v2168
    %2171 = vst.msk [vmem:[#allocation2 + $0x8] sm:$0xff] %vm24, %v2169
    // Predicated region
    $region14: #{tpu_custom_call.1} parent=1 // pred_check
      _
    $region15: #{tpu_custom_call.1} parent=1 // pred_check_branch
      %2173 = sbr.rel (0) target = $region17
    $region16: #{tpu_custom_call.1} parent=1 // pred_region
      %s2175 = ssub.s32 256, 256
      %2176 = vsyncadd [#allocation3], %s2175
      %s2177 = sshll.u32 [#allocation2], 4
      %s2178 = int_to_ptr.vmem [resolvable:$true] %s2177
      %2183 = dma.vmem_to_hbm [thread:$0]  %s2178, 256, %s3, [#allocation3], 128, 128, 8
    $region17: #{tpu_custom_call.1} parent=1 // pred_fallthru
      _
    // Predicated region
    $region18: #{tpu_custom_call.1} parent=1 // pred_check
      _
    $region19: #{tpu_custom_call.1} parent=1 // pred_check_branch
      %2185 = sbr.rel (0) target = $region21
    $region20: #{tpu_custom_call.1} parent=1 // pred_region
      %2186 = dma.done [#allocation3], 256
    $region21: #{tpu_custom_call.1} parent=1 // pred_fallthru
      _
    %2187 = vsyncpa [#allocation3], 1

</llo_original>
